<compile_context>
chip_gen: v7x
topology: tpu7x:2x2x1
jax: 0.10.0
libtpu: 0.0.40
codegen_flags: <defaults>
</compile_context>

<pallas_src>
import functools

import jax
import jax.numpy as jnp
from jax.experimental import pallas as pl
from jax.experimental.pallas import tpu as pltpu


def _round_up(x, m):
    return ((x + m - 1) // m) * m


# --------------------------- shared kernel tail ---------------------------- #

def _conv_tail(conv3, bias_ref, mask_ref, wfc_ref, bfc_ref, out_ref):
    """conv3: (TB, L_rows, C) f32 conv pre-activations, all filters packed on lanes."""
    act = jnp.maximum(conv3 + bias_ref[...][None, :, :], 0.0)      # bias + ReLU (VPU)
    act = act + mask_ref[...][None, :, :]                          # mask invalid time rows
    pooled = jnp.max(act, axis=1)                                  # max over time -> (TB, C)
    out_ref[...] = jnp.dot(pooled, wfc_ref[...],
                           preferred_element_type=jnp.float32) + bfc_ref[...]


# ------------------------- kernel A: gather path --------------------------- #
# Small vocab: TW_stack[(i*V_pad + v), :] = embedding[v] @ W_i (tap i of every
# filter, packed on lanes).  conv[b,t,:] = sum_i TW_i[ids[b,t+i]] is computed as
# ONE multi-hot matmul (K = max_fs*V_pad).  Only int32 ids enter the kernel.

def _make_gather_kernel(max_fs, TB, L_rows, V_pad, C):
    rows = TB * L_rows

    def kernel(ids_ref, tw_ref, bias_ref, mask_ref, wfc_ref, bfc_ref, out_ref):
        lane_iota = jax.lax.broadcasted_iota(jnp.int32, (rows, V_pad), 1)
        ohs = []
        for i in range(max_fs):
            ids_i = ids_ref[i]                                     # (rows, 1) int32
            ohs.append((ids_i == lane_iota).astype(jnp.float32))   # (rows, V_pad)
        mh = ohs[0] if max_fs == 1 else jnp.concatenate(ohs, axis=1)
        conv = jnp.dot(mh, tw_ref[...],
                       preferred_element_type=jnp.float32)         # (rows, C)
        _conv_tail(conv.reshape(TB, L_rows, C),
                   bias_ref, mask_ref, wfc_ref, bfc_ref, out_ref)

    return kernel


# ------------------------- kernel B: matmul path --------------------------- #
# General vocab: embedded tokens (bf16) x per-tap packed weights; tap i of filter j
# lives in lane group i at lanes [j*NF, (j+1)*NF) (zero if i >= fs_j), so a plain
# slice-and-add over lane-aligned groups yields the conv for every filter at once.

def _make_matmul_kernel(max_fs, TB, S_pad, L_rows, C):
    def kernel(x_ref, w_ref, bias_ref, mask_ref, wfc_ref, bfc_ref, out_ref):
        p = jnp.dot(x_ref[...], w_ref[...],
                    preferred_element_type=jnp.float32)            # (TB*S_pad, max_fs*C)
        p3 = p.reshape(TB, S_pad, max_fs * C)
        conv = p3[:, 0:L_rows, 0:C]
        for i in range(1, max_fs):
            conv = conv + p3[:, i:i + L_rows, i * C:(i + 1) * C]
        _conv_tail(conv, bias_ref, mask_ref, wfc_ref, bfc_ref, out_ref)

    return kernel


# ------------------------------ JAX wrapper -------------------------------- #

class IntentModelPallas:
    def __init__(self, vocab_size, embedding_dim, n_filters, filter_sizes,
                 output_dim, dropout, pad_idx, key):
        self.vocab_size = int(vocab_size)
        self.embedding_dim = int(embedding_dim)
        self.n_filters = int(n_filters)
        self.filter_sizes = tuple(int(f) for f in filter_sizes)
        self.output_dim = int(output_dim)
        self.dropout = dropout                 # identity at inference
        self.pad_idx = pad_idx
        n_fs = len(self.filter_sizes)
        self.max_fs = max(self.filter_sizes)

        keys = iter(jax.random.split(key, 2 * n_fs + 3))

        # Master parameters in f32 (matches PyTorch precision for the reference).
        self.embedding = jax.random.normal(next(keys), (vocab_size, embedding_dim),
                                           dtype=jnp.float32) * 0.1
        self.conv_ws, self.conv_bs = [], []
        for fs in self.filter_sizes:
            w = jax.random.normal(next(keys), (fs, embedding_dim, n_filters),
                                  dtype=jnp.float32) * 0.1          # (fs, E, NF)
            b = jax.random.normal(next(keys), (n_filters,), dtype=jnp.float32) * 0.1
            self.conv_ws.append(w)
            self.conv_bs.append(b)
        in_feat = n_fs * n_filters
        self.fc_w = jax.random.normal(next(keys), (in_feat, output_dim),
                                      dtype=jnp.float32) * 0.1       # (in, out)
        self.fc_b = jax.random.normal(next(keys), (output_dim,), dtype=jnp.float32) * 0.1

        # ---- compact, lane-dense packed parameters ----
        self.C = _round_up(n_fs * n_filters, 128)     # shared conv-output lane group(s)
        self.out_p = _round_up(output_dim, 128)       # lane-dense fc output
        self.v_pad = _round_up(vocab_size, 128)

        w_taps = []
        for i in range(self.max_fs):
            wi = jnp.zeros((embedding_dim, self.C), jnp.float32)
            for j, fs in enumerate(self.filter_sizes):
                if i < fs:
                    wi = wi.at[:, j * n_filters:(j + 1) * n_filters].set(self.conv_ws[j][i])
            w_taps.append(wi)
        self.w_cat = jnp.concatenate(w_taps, axis=1)                 # (E, max_fs*C) f32
        self.w_cat_bf16 = self.w_cat.astype(jnp.bfloat16)

        bias_vec = jnp.zeros((1, self.C), jnp.float32)
        for j in range(n_fs):
            bias_vec = bias_vec.at[0, j * n_filters:(j + 1) * n_filters].set(self.conv_bs[j])
        self.bias_vec = bias_vec

        wfc = jnp.zeros((self.C, self.out_p), jnp.float32)
        wfc = wfc.at[:in_feat, :output_dim].set(self.fc_w)
        self.wfc = wfc
        self.bfc = jnp.zeros((1, self.out_p), jnp.float32).at[0, :output_dim].set(self.fc_b)

        # Small-vocab fast path: fold table @ conv weights into per-tap tables so the
        # kernel never sees the (B,S,E) activation (no extra HBM round trip).
        tw_bytes = self.max_fs * self.v_pad * self.C * 4
        if tw_bytes <= 4 * 2 ** 20:
            table_pad = jnp.zeros((self.v_pad, embedding_dim), jnp.float32
                                  ).at[:vocab_size].set(self.embedding)
            tws = [jnp.dot(table_pad, w_taps[i], precision=jax.lax.Precision.HIGHEST)
                   for i in range(self.max_fs)]
            self.tw_stack = jnp.concatenate(tws, axis=0)             # (max_fs*V_pad, C)
        else:
            self.tw_stack = None

        # Generation-aware VMEM budget (v5e/v6e: 128 MiB physical, v7x: 64 MiB).
        try:
            cap = int(pltpu.get_tpu_info().vmem_capacity_bytes)
        except Exception:
            cap = 64 * 2 ** 20
        self.vmem_limit = int(min(max(cap // 2, 16 * 2 ** 20), 64 * 2 ** 20))

    # ------------------------------ tiling -------------------------------- #

    def _choose_tb(self, B, per_elem_bytes, const_bytes):
        b8 = _round_up(max(B, 1), 8)
        budget = max(2 * 2 ** 20, self.vmem_limit // 2 - const_bytes)
        cap = max(8, int(budget // max(per_elem_bytes, 1)) // 8 * 8)
        tb = max(8, (min(b8, 256, cap) // 8) * 8)        # always a multiple of 8
        # Prefer >= 2 grid steps when the batch allows (v7x dual TensorCore) without
        # adding batch padding: pick a tile that divides b8.
        if b8 >= 16 and b8 // tb < 2:
            n8 = b8 // 8
            g = max(d for d in range(1, n8 // 2 + 1) if n8 % d == 0)
            tb = min(tb, 8 * g)
        return tb

    # ------------------------------ forward ------------------------------- #

    @functools.partial(jax.jit, static_argnums=(0, 2, 3))
    def _forward(self, text, use_gather, single_buffer):
        # text: (seq_len, batch) int token ids (same convention as the PyTorch module).
        S, B = text.shape
        fsz = self.filter_sizes
        if S < max(fsz):
            raise ValueError("sequence shorter than the largest filter size")
        E = self.embedding_dim
        NF = self.n_filters
        C = self.C
        OUT_P = self.out_p
        max_fs = self.max_fs

        L_max = S - min(fsz) + 1
        L_rows = _round_up(L_max, 8)     # time rows kept sublane-aligned

        # Time-validity mask: filter j only pools over t < L_j = S - fs_j + 1.
        t_idx = jnp.arange(L_rows, dtype=jnp.int32)[:, None]
        mask = jnp.zeros((L_rows, C), jnp.float32)
        for j, fs in enumerate(fsz):
            lj = S - fs + 1
            mj = jnp.where(t_idx < lj, 0.0, -1e30).astype(jnp.float32)
            mask = mask.at[:, j * NF:(j + 1) * NF].set(jnp.broadcast_to(mj, (L_rows, NF)))

        def const_spec(shape):
            n = len(shape)
            if single_buffer:
                return pl.BlockSpec(shape, lambda b, n=n: (0,) * n,
                                    pipeline_mode=pl.Buffered(1))
            return pl.BlockSpec(shape, lambda b, n=n: (0,) * n)

        cparams = pltpu.CompilerParams(dimension_semantics=("parallel",),
                                       vmem_limit_bytes=self.vmem_limit)

        if use_gather:
            # ---------------- small-vocab gather path ---------------- #
            V_pad = self.v_pad
            per_elem = (L_rows * max_fs * 4 * 2                 # ids (double buffered)
                        + L_rows * max_fs * V_pad * 4           # multi-hot
                        + 4 * L_rows * C * 4                    # conv/act temporaries
                        + 2 * OUT_P * 4)
            const_b = (max_fs * V_pad * C + C * OUT_P + L_rows * C + C + OUT_P) * 4
            const_b *= 1 if single_buffer else 2
            TB = self._choose_tb(B, per_elem, const_b)
            B_pad = _round_up(B, TB)

            # Shifted token ids (pad id == vocab_size hits an all-zero TW row).
            pad_id = jnp.int32(self.vocab_size)
            s_need = L_rows + max_fs - 1
            tpad = jnp.full((s_need, B_pad), pad_id, jnp.int32
                            ).at[:S, :B].set(text.astype(jnp.int32))
            ids = jnp.stack([tpad[i:i + L_rows, :].T for i in range(max_fs)], axis=0)
            ids = ids.reshape(max_fs, B_pad * L_rows, 1)         # (max_fs, rows, 1)

            kernel = _make_gather_kernel(max_fs, TB, L_rows, V_pad, C)
            out = pl.pallas_call(
                kernel,
                out_shape=jax.ShapeDtypeStruct((B_pad, OUT_P), jnp.float32),
                grid=(B_pad // TB,),
                in_specs=[
                    pl.BlockSpec((max_fs, TB * L_rows, 1), lambda b: (0, b, 0)),
                    const_spec((max_fs * V_pad, C)),
                    const_spec((1, C)),
                    const_spec((L_rows, C)),
                    const_spec((C, OUT_P)),
                    const_spec((1, OUT_P)),
                ],
                out_specs=pl.BlockSpec((TB, OUT_P), lambda b: (b, 0)),
                compiler_params=cparams,
            )(ids, self.tw_stack, self.bias_vec, mask, self.wfc, self.bfc)
        else:
            # ---------------- general (large-vocab) matmul path ---------------- #
            S_pad = _round_up(max(S, L_rows + max_fs - 1), 8)
            per_elem = (S_pad * E * 2 * 2                       # x (bf16, double buffered)
                        + S_pad * max_fs * C * 4                # P
                        + 4 * L_rows * C * 4
                        + 2 * OUT_P * 4)
            const_b = (E * max_fs * C * 2
                       + (C * OUT_P + L_rows * C + C + OUT_P) * 4)
            const_b *= 1 if single_buffer else 2
            TB = self._choose_tb(B, per_elem, const_b)
            B_pad = _round_up(B, TB)

            # TODO(synk): fuse this gather into the kernel (scalar-prefetched ids +
            # DMA rows from an HBM-resident table) so the (B,S,E) activation never
            # takes an HBM round trip on the large-vocab path.
            emb = jnp.take(self.embedding, text.T.astype(jnp.int32),
                           axis=0).astype(jnp.bfloat16)          # (B, S, E)
            x = jnp.zeros((B_pad, S_pad, E), jnp.bfloat16).at[:B, :S, :].set(emb)
            x2 = x.reshape(B_pad * S_pad, E)

            kernel = _make_matmul_kernel(max_fs, TB, S_pad, L_rows, C)
            out = pl.pallas_call(
                kernel,
                out_shape=jax.ShapeDtypeStruct((B_pad, OUT_P), jnp.float32),
                grid=(B_pad // TB,),
                in_specs=[
                    pl.BlockSpec((TB * S_pad, E), lambda b: (b, 0)),
                    const_spec((E, max_fs * C)),
                    const_spec((1, C)),
                    const_spec((L_rows, C)),
                    const_spec((C, OUT_P)),
                    const_spec((1, OUT_P)),
                ],
                out_specs=pl.BlockSpec((TB, OUT_P), lambda b: (b, 0)),
                compiler_params=cparams,
            )(x2, self.w_cat_bf16, self.bias_vec, mask, self.wfc, self.bfc)

        # Drop batch / lane padding (padded lanes carry zero fc weight anyway).
        return out[:B, :self.output_dim]

    def __call__(self, text, use_gather=None):
        if use_gather is None:
            use_gather = self.tw_stack is not None
        use_gather = bool(use_gather) and (self.tw_stack is not None)
        try:
            # Preferred: single-buffer the grid-invariant operands (halves their VMEM).
            return self._forward(text, use_gather, True)
        except Exception:
            # Fallback for JAX versions without BlockSpec(pipeline_mode=...).
            return self._forward(text, use_gather, False)


# ------------------------- pure-JAX reference check ------------------------ #

def _reference_forward(model, text):
    emb = jnp.take(model.embedding, text.T.astype(jnp.int32), axis=0)   # (B, S, E) f32
    B, S, E = emb.shape
    pooled = []
    for fs, w, b in zip(model.filter_sizes, model.conv_ws, model.conv_bs):
        L = S - fs + 1
        acc = jnp.zeros((B, L, model.n_filters), jnp.float32)
        for i in range(fs):
            acc = acc + jnp.einsum('ble,ef->blf', emb[:, i:i + L, :], w[i],
                                   precision=jax.lax.Precision.HIGHEST)
        acc = jax.nn.relu(acc + b.reshape(1, 1, -1))
        pooled.append(jnp.max(acc, axis=1))
    cat = jnp.concatenate(pooled, axis=1)
    return jnp.dot(cat, model.fc_w, precision=jax.lax.Precision.HIGHEST) + model.fc_b


# ---------------------------------- main ----------------------------------- #

if __name__ == "__main__":
    vocab_size = 50
    embedding_dim = 32
    n_filters = 8
    filter_sizes = (2, 3, 4)
    output_dim = 5
    dropout = 0.5
    pad_idx = 0
    seq_len = 8
    batch = 2

    key = jax.random.PRNGKey(0)
    k_param, k_text = jax.random.split(key)

    model = IntentModelPallas(vocab_size, embedding_dim, n_filters, filter_sizes,
                              output_dim, dropout, pad_idx, k_param)

    # text: (seq_len, batch) integer token ids, matching the PyTorch call convention.
    text = jax.random.randint(k_text, (seq_len, batch), 0, vocab_size, dtype=jnp.int32)

    ref = _reference_forward(model, text)

    # Small-vocab gather path (the optimized path for this configuration).
    out_a = jax.block_until_ready(model(text))
    assert out_a.shape == (batch, output_dim)
    assert jnp.allclose(out_a, ref, atol=2e-3, rtol=2e-3), (
        f"gather path max abs err {jnp.max(jnp.abs(out_a - ref))}")

    # General (matmul) path, exercised explicitly for coverage.
    out_b = jax.block_until_ready(model(text, use_gather=False))
    assert out_b.shape == (batch, output_dim)
    assert jnp.allclose(out_b, ref, atol=5e-3, rtol=5e-3), (
        f"matmul path max abs err {jnp.max(jnp.abs(out_b - ref))}")

    print("KERNEL_OK")
</pallas_src>

<mosaic_0001>
module attributes {stable_mosaic.version = 11 : i64} {
  func.func @kernel(%arg0: i32, %arg1: memref<4x64x1xi32, #tpu.memory_space<vmem>>, %arg2: memref<512x128xf32, #tpu.memory_space<vmem>>, %arg3: memref<1x128xf32, #tpu.memory_space<vmem>>, %arg4: memref<8x128xf32, #tpu.memory_space<vmem>>, %arg5: memref<128x128xf32, #tpu.memory_space<vmem>>, %arg6: memref<1x128xf32, #tpu.memory_space<vmem>>, %arg7: memref<8x128xf32, #tpu.memory_space<vmem>>) attributes {dimension_semantics = [#tpu.dimension_semantics<parallel>], iteration_bounds = array<i64: 1>, scalar_prefetch = 0 : i64, scratch_operands = 0 : i64, tpu.core_type = #tpu.core_type<tc>, window_params = [{transform_indices = @transform_0, window_bounds = array<i64: 4, 64, 1>}, {pipeline_mode = #tpu.pipeline_mode<synchronous>, transform_indices = @transform_1, window_bounds = array<i64: 512, 128>}, {pipeline_mode = #tpu.pipeline_mode<synchronous>, transform_indices = @transform_2, window_bounds = array<i64: 1, 128>}, {pipeline_mode = #tpu.pipeline_mode<synchronous>, transform_indices = @transform_3, window_bounds = array<i64: 8, 128>}, {pipeline_mode = #tpu.pipeline_mode<synchronous>, transform_indices = @transform_4, window_bounds = array<i64: 128, 128>}, {pipeline_mode = #tpu.pipeline_mode<synchronous>, transform_indices = @transform_5, window_bounds = array<i64: 1, 128>}, {transform_indices = @transform_6, window_bounds = array<i64: 8, 128>}]} {
    %0 = tpu.iota {dimensions = array<i32: 1>} : vector<64x128xi32>
    %c0 = arith.constant 0 : index
    %c0_0 = arith.constant 0 : index
    %c0_1 = arith.constant 0 : index
    %1 = vector.load %arg1[%c0, %c0_0, %c0_1] : memref<4x64x1xi32, #tpu.memory_space<vmem>>, vector<1x64x1xi32>
    %2 = vector.shape_cast %1 : vector<1x64x1xi32> to vector<64x1xi32>
    %3 = vector.broadcast %2 : vector<64x1xi32> to vector<64x128xi32>
    %4 = arith.cmpi eq, %3, %0 : vector<64x128xi32>
    %5 = arith.extui %4 : vector<64x128xi1> to vector<64x128xi32>
    %6 = arith.sitofp %5 : vector<64x128xi32> to vector<64x128xf32>
    %c1 = arith.constant 1 : index
    %c0_2 = arith.constant 0 : index
    %c0_3 = arith.constant 0 : index
    %7 = vector.load %arg1[%c1, %c0_2, %c0_3] : memref<4x64x1xi32, #tpu.memory_space<vmem>>, vector<1x64x1xi32>
    %8 = vector.shape_cast %7 : vector<1x64x1xi32> to vector<64x1xi32>
    %9 = vector.broadcast %8 : vector<64x1xi32> to vector<64x128xi32>
    %10 = arith.cmpi eq, %9, %0 : vector<64x128xi32>
    %11 = arith.extui %10 : vector<64x128xi1> to vector<64x128xi32>
    %12 = arith.sitofp %11 : vector<64x128xi32> to vector<64x128xf32>
    %c2 = arith.constant 2 : index
    %c0_4 = arith.constant 0 : index
    %c0_5 = arith.constant 0 : index
    %13 = vector.load %arg1[%c2, %c0_4, %c0_5] : memref<4x64x1xi32, #tpu.memory_space<vmem>>, vector<1x64x1xi32>
    %14 = vector.shape_cast %13 : vector<1x64x1xi32> to vector<64x1xi32>
    %15 = vector.broadcast %14 : vector<64x1xi32> to vector<64x128xi32>
    %16 = arith.cmpi eq, %15, %0 : vector<64x128xi32>
    %17 = arith.extui %16 : vector<64x128xi1> to vector<64x128xi32>
    %18 = arith.sitofp %17 : vector<64x128xi32> to vector<64x128xf32>
    %c3 = arith.constant 3 : index
    %c0_6 = arith.constant 0 : index
    %c0_7 = arith.constant 0 : index
    %19 = vector.load %arg1[%c3, %c0_6, %c0_7] : memref<4x64x1xi32, #tpu.memory_space<vmem>>, vector<1x64x1xi32>
    %20 = vector.shape_cast %19 : vector<1x64x1xi32> to vector<64x1xi32>
    %21 = vector.broadcast %20 : vector<64x1xi32> to vector<64x128xi32>
    %22 = arith.cmpi eq, %21, %0 : vector<64x128xi32>
    %23 = arith.extui %22 : vector<64x128xi1> to vector<64x128xi32>
    %24 = arith.sitofp %23 : vector<64x128xi32> to vector<64x128xf32>
    %25 = tpu.concatenate %6, %12, %18, %24 in 1 : vector<64x128xf32>, vector<64x128xf32>, vector<64x128xf32>, vector<64x128xf32> -> vector<64x512xf32>
    %c0_8 = arith.constant 0 : index
    %c0_9 = arith.constant 0 : index
    %26 = vector.load %arg2[%c0_8, %c0_9] : memref<512x128xf32, #tpu.memory_space<vmem>>, vector<512x128xf32>
    %cst = arith.constant dense<0.000000e+00> : vector<64x128xf32>
    %27 = tpu.matmul %25, %26, %cst {dimension_numbers = #tpu.dot_dimension_numbers<[1], [0], [0], [1], [0, 0, 1, 1], [], []>} : vector<64x512xf32>, vector<512x128xf32>, vector<64x128xf32> -> vector<64x128xf32>
    %28 = vector.shape_cast %27 : vector<64x128xf32> to vector<8x8x128xf32>
    %c0_10 = arith.constant 0 : index
    %c0_11 = arith.constant 0 : index
    %29 = vector.load %arg3[%c0_10, %c0_11] : memref<1x128xf32, #tpu.memory_space<vmem>>, vector<1x128xf32>
    %30 = vector.shape_cast %29 : vector<1x128xf32> to vector<1x1x128xf32>
    %31 = vector.broadcast %30 : vector<1x1x128xf32> to vector<8x8x128xf32>
    %32 = arith.addf %28, %31 : vector<8x8x128xf32>
    %cst_12 = arith.constant 0.000000e+00 : f32
    %33 = vector.broadcast %cst_12 : f32 to vector<8x8x128xf32>
    %34 = arith.maximumf %32, %33 : vector<8x8x128xf32>
    %c0_13 = arith.constant 0 : index
    %c0_14 = arith.constant 0 : index
    %35 = vector.load %arg4[%c0_13, %c0_14] : memref<8x128xf32, #tpu.memory_space<vmem>>, vector<8x128xf32>
    %36 = vector.shape_cast %35 : vector<8x128xf32> to vector<1x8x128xf32>
    %37 = vector.broadcast %36 : vector<1x8x128xf32> to vector<8x8x128xf32>
    %38 = arith.addf %34, %37 : vector<8x8x128xf32>
    %cst_15 = arith.constant dense<0xFF800000> : vector<8x128xf32>
    %39 = vector.multi_reduction <maximumf>, %38, %cst_15 [1] : vector<8x8x128xf32> to vector<8x128xf32>
    %c0_16 = arith.constant 0 : index
    %c0_17 = arith.constant 0 : index
    %40 = vector.load %arg5[%c0_16, %c0_17] : memref<128x128xf32, #tpu.memory_space<vmem>>, vector<128x128xf32>
    %cst_18 = arith.constant dense<0.000000e+00> : vector<8x128xf32>
    %41 = tpu.matmul %39, %40, %cst_18 {dimension_numbers = #tpu.dot_dimension_numbers<[1], [0], [0], [1], [0, 0, 1, 1], [], []>} : vector<8x128xf32>, vector<128x128xf32>, vector<8x128xf32> -> vector<8x128xf32>
    %c0_19 = arith.constant 0 : index
    %c0_20 = arith.constant 0 : index
    %42 = vector.load %arg6[%c0_19, %c0_20] : memref<1x128xf32, #tpu.memory_space<vmem>>, vector<1x128xf32>
    %43 = vector.broadcast %42 : vector<1x128xf32> to vector<8x128xf32>
    %44 = arith.addf %41, %43 : vector<8x128xf32>
    %c0_21 = arith.constant 0 : index
    %c0_22 = arith.constant 0 : index
    %45 = vector.load %arg7[%c0_21, %c0_22] : memref<8x128xf32, #tpu.memory_space<vmem>>, vector<8x128xf32>
    tpu.vector_store %arg7[%c0_21, %c0_22], %44 {strides = array<i32>} : memref<8x128xf32, #tpu.memory_space<vmem>>, vector<8x128xf32>,
    return
  }
  func.func @transform_0(%arg0: i32) -> (i32, i32, i32) {
    %c0_i32 = arith.constant 0 : i32
    %c0_i32_0 = arith.constant 0 : i32
    %c0_i32_1 = arith.constant 0 : i32
    return %c0_i32, %arg0, %c0_i32_0 : i32, i32, i32
  }
  func.func @transform_1(%arg0: i32) -> (i32, i32) {
    %c0_i32 = arith.constant 0 : i32
    %c0_i32_0 = arith.constant 0 : i32
    %c0_i32_1 = arith.constant 0 : i32
    return %c0_i32, %c0_i32_0 : i32, i32
  }
  func.func @transform_2(%arg0: i32) -> (i32, i32) {
    %c0_i32 = arith.constant 0 : i32
    %c0_i32_0 = arith.constant 0 : i32
    %c0_i32_1 = arith.constant 0 : i32
    return %c0_i32, %c0_i32_0 : i32, i32
  }
  func.func @transform_3(%arg0: i32) -> (i32, i32) {
    %c0_i32 = arith.constant 0 : i32
    %c0_i32_0 = arith.constant 0 : i32
    %c0_i32_1 = arith.constant 0 : i32
    return %c0_i32, %c0_i32_0 : i32, i32
  }
  func.func @transform_4(%arg0: i32) -> (i32, i32) {
    %c0_i32 = arith.constant 0 : i32
    %c0_i32_0 = arith.constant 0 : i32
    %c0_i32_1 = arith.constant 0 : i32
    return %c0_i32, %c0_i32_0 : i32, i32
  }
  func.func @transform_5(%arg0: i32) -> (i32, i32) {
    %c0_i32 = arith.constant 0 : i32
    %c0_i32_0 = arith.constant 0 : i32
    %c0_i32_1 = arith.constant 0 : i32
    return %c0_i32, %c0_i32_0 : i32, i32
  }
  func.func @transform_6(%arg0: i32) -> (i32, i32) {
    %c0_i32 = arith.constant 0 : i32
    %c0_i32_0 = arith.constant 0 : i32
    return %arg0, %c0_i32 : i32, i32
  }
}

module attributes {stable_mosaic.version = 11 : i64} {
  func.func @kernel(%arg0: i32, %arg1: memref<4x64x1xi32, #tpu.memory_space<vmem>>, %arg2: memref<512x128xf32, #tpu.memory_space<vmem>>, %arg3: memref<1x128xf32, #tpu.memory_space<vmem>>, %arg4: memref<8x128xf32, #tpu.memory_space<vmem>>, %arg5: memref<128x128xf32, #tpu.memory_space<vmem>>, %arg6: memref<1x128xf32, #tpu.memory_space<vmem>>, %arg7: memref<8x128xf32, #tpu.memory_space<vmem>>) attributes {dimension_semantics = [#tpu.dimension_semantics<parallel>], iteration_bounds = array<i64: 1>, scalar_prefetch = 0 : i64, scratch_operands = 0 : i64, tpu.core_type = #tpu.core_type<tc>, window_params = [{transform_indices = @transform_0, window_bounds = array<i64: 4, 64, 1>}, {pipeline_mode = #tpu.pipeline_mode<synchronous>, transform_indices = @transform_1, window_bounds = array<i64: 512, 128>}, {pipeline_mode = #tpu.pipeline_mode<synchronous>, transform_indices = @transform_2, window_bounds = array<i64: 1, 128>}, {pipeline_mode = #tpu.pipeline_mode<synchronous>, transform_indices = @transform_3, window_bounds = array<i64: 8, 128>}, {pipeline_mode = #tpu.pipeline_mode<synchronous>, transform_indices = @transform_4, window_bounds = array<i64: 128, 128>}, {pipeline_mode = #tpu.pipeline_mode<synchronous>, transform_indices = @transform_5, window_bounds = array<i64: 1, 128>}, {transform_indices = @transform_6, window_bounds = array<i64: 8, 128>}]} {
    %0 = tpu.iota {dimensions = array<i32: 1>} : vector<64x128xi32>
    %c0 = arith.constant 0 : index
    %c0_0 = arith.constant 0 : index
    %c0_1 = arith.constant 0 : index
    %1 = vector.load %arg1[%c0, %c0_0, %c0_1] : memref<4x64x1xi32, #tpu.memory_space<vmem>>, vector<1x64x1xi32>
    %2 = vector.shape_cast %1 : vector<1x64x1xi32> to vector<64x1xi32>
    %3 = vector.broadcast %2 : vector<64x1xi32> to vector<64x128xi32>
    %4 = arith.cmpi eq, %3, %0 : vector<64x128xi32>
    %5 = arith.extui %4 : vector<64x128xi1> to vector<64x128xi32>
    %6 = arith.sitofp %5 : vector<64x128xi32> to vector<64x128xf32>
    %c1 = arith.constant 1 : index
    %c0_2 = arith.constant 0 : index
    %c0_3 = arith.constant 0 : index
    %7 = vector.load %arg1[%c1, %c0_2, %c0_3] : memref<4x64x1xi32, #tpu.memory_space<vmem>>, vector<1x64x1xi32>
    %8 = vector.shape_cast %7 : vector<1x64x1xi32> to vector<64x1xi32>
    %9 = vector.broadcast %8 : vector<64x1xi32> to vector<64x128xi32>
    %10 = arith.cmpi eq, %9, %0 : vector<64x128xi32>
    %11 = arith.extui %10 : vector<64x128xi1> to vector<64x128xi32>
    %12 = arith.sitofp %11 : vector<64x128xi32> to vector<64x128xf32>
    %c2 = arith.constant 2 : index
    %c0_4 = arith.constant 0 : index
    %c0_5 = arith.constant 0 : index
    %13 = vector.load %arg1[%c2, %c0_4, %c0_5] : memref<4x64x1xi32, #tpu.memory_space<vmem>>, vector<1x64x1xi32>
    %14 = vector.shape_cast %13 : vector<1x64x1xi32> to vector<64x1xi32>
    %15 = vector.broadcast %14 : vector<64x1xi32> to vector<64x128xi32>
    %16 = arith.cmpi eq, %15, %0 : vector<64x128xi32>
    %17 = arith.extui %16 : vector<64x128xi1> to vector<64x128xi32>
    %18 = arith.sitofp %17 : vector<64x128xi32> to vector<64x128xf32>
    %c3 = arith.constant 3 : index
    %c0_6 = arith.constant 0 : index
    %c0_7 = arith.constant 0 : index
    %19 = vector.load %arg1[%c3, %c0_6, %c0_7] : memref<4x64x1xi32, #tpu.memory_space<vmem>>, vector<1x64x1xi32>
    %20 = vector.shape_cast %19 : vector<1x64x1xi32> to vector<64x1xi32>
    %21 = vector.broadcast %20 : vector<64x1xi32> to vector<64x128xi32>
    %22 = arith.cmpi eq, %21, %0 : vector<64x128xi32>
    %23 = arith.extui %22 : vector<64x128xi1> to vector<64x128xi32>
    %24 = arith.sitofp %23 : vector<64x128xi32> to vector<64x128xf32>
    %25 = tpu.concatenate %6, %12, %18, %24 in 1 : vector<64x128xf32>, vector<64x128xf32>, vector<64x128xf32>, vector<64x128xf32> -> vector<64x512xf32>
    %c0_8 = arith.constant 0 : index
    %c0_9 = arith.constant 0 : index
    %26 = vector.load %arg2[%c0_8, %c0_9] : memref<512x128xf32, #tpu.memory_space<vmem>>, vector<512x128xf32>
    %cst = arith.constant dense<0.000000e+00> : vector<64x128xf32>
    %27 = tpu.matmul %25, %26, %cst {dimension_numbers = #tpu.dot_dimension_numbers<[1], [0], [0], [1], [0, 0, 1, 1], [], []>} : vector<64x512xf32>, vector<512x128xf32>, vector<64x128xf32> -> vector<64x128xf32>
    %28 = vector.shape_cast %27 : vector<64x128xf32> to vector<8x8x128xf32>
    %c0_10 = arith.constant 0 : index
    %c0_11 = arith.constant 0 : index
    %29 = vector.load %arg3[%c0_10, %c0_11] : memref<1x128xf32, #tpu.memory_space<vmem>>, vector<1x128xf32>
    %30 = vector.shape_cast %29 : vector<1x128xf32> to vector<1x1x128xf32>
    %31 = vector.broadcast %30 : vector<1x1x128xf32> to vector<8x8x128xf32>
    %32 = arith.addf %28, %31 : vector<8x8x128xf32>
    %cst_12 = arith.constant 0.000000e+00 : f32
    %33 = vector.broadcast %cst_12 : f32 to vector<8x8x128xf32>
    %34 = arith.maximumf %32, %33 : vector<8x8x128xf32>
    %c0_13 = arith.constant 0 : index
    %c0_14 = arith.constant 0 : index
    %35 = vector.load %arg4[%c0_13, %c0_14] : memref<8x128xf32, #tpu.memory_space<vmem>>, vector<8x128xf32>
    %36 = vector.shape_cast %35 : vector<8x128xf32> to vector<1x8x128xf32>
    %37 = vector.broadcast %36 : vector<1x8x128xf32> to vector<8x8x128xf32>
    %38 = arith.addf %34, %37 : vector<8x8x128xf32>
    %cst_15 = arith.constant dense<0xFF800000> : vector<8x128xf32>
    %39 = vector.multi_reduction <maximumf>, %38, %cst_15 [1] : vector<8x8x128xf32> to vector<8x128xf32>
    %c0_16 = arith.constant 0 : index
    %c0_17 = arith.constant 0 : index
    %40 = vector.load %arg5[%c0_16, %c0_17] : memref<128x128xf32, #tpu.memory_space<vmem>>, vector<128x128xf32>
    %cst_18 = arith.constant dense<0.000000e+00> : vector<8x128xf32>
    %41 = tpu.matmul %39, %40, %cst_18 {dimension_numbers = #tpu.dot_dimension_numbers<[1], [0], [0], [1], [0, 0, 1, 1], [], []>} : vector<8x128xf32>, vector<128x128xf32>, vector<8x128xf32> -> vector<8x128xf32>
    %c0_19 = arith.constant 0 : index
    %c0_20 = arith.constant 0 : index
    %42 = vector.load %arg6[%c0_19, %c0_20] : memref<1x128xf32, #tpu.memory_space<vmem>>, vector<1x128xf32>
    %43 = vector.broadcast %42 : vector<1x128xf32> to vector<8x128xf32>
    %44 = arith.addf %41, %43 : vector<8x128xf32>
    %c0_21 = arith.constant 0 : index
    %c0_22 = arith.constant 0 : index
    %45 = vector.load %arg7[%c0_21, %c0_22] : memref<8x128xf32, #tpu.memory_space<vmem>>, vector<8x128xf32>
    tpu.vector_store %arg7[%c0_21, %c0_22], %44 {strides = array<i32>} : memref<8x128xf32, #tpu.memory_space<vmem>>, vector<8x128xf32>,
    return
  }
  func.func @transform_0(%arg0: i32) -> (i32, i32, i32) {
    %c0_i32 = arith.constant 0 : i32
    %c0_i32_0 = arith.constant 0 : i32
    %c0_i32_1 = arith.constant 0 : i32
    return %c0_i32, %arg0, %c0_i32_0 : i32, i32, i32
  }
  func.func @transform_1(%arg0: i32) -> (i32, i32) {
    %c0_i32 = arith.constant 0 : i32
    %c0_i32_0 = arith.constant 0 : i32
    %c0_i32_1 = arith.constant 0 : i32
    return %c0_i32, %c0_i32_0 : i32, i32
  }
  func.func @transform_2(%arg0: i32) -> (i32, i32) {
    %c0_i32 = arith.constant 0 : i32
    %c0_i32_0 = arith.constant 0 : i32
    %c0_i32_1 = arith.constant 0 : i32
    return %c0_i32, %c0_i32_0 : i32, i32
  }
  func.func @transform_3(%arg0: i32) -> (i32, i32) {
    %c0_i32 = arith.constant 0 : i32
    %c0_i32_0 = arith.constant 0 : i32
    %c0_i32_1 = arith.constant 0 : i32
    return %c0_i32, %c0_i32_0 : i32, i32
  }
  func.func @transform_4(%arg0: i32) -> (i32, i32) {
    %c0_i32 = arith.constant 0 : i32
    %c0_i32_0 = arith.constant 0 : i32
    %c0_i32_1 = arith.constant 0 : i32
    return %c0_i32, %c0_i32_0 : i32, i32
  }
  func.func @transform_5(%arg0: i32) -> (i32, i32) {
    %c0_i32 = arith.constant 0 : i32
    %c0_i32_0 = arith.constant 0 : i32
    %c0_i32_1 = arith.constant 0 : i32
    return %c0_i32, %c0_i32_0 : i32, i32
  }
  func.func @transform_6(%arg0: i32) -> (i32, i32) {
    %c0_i32 = arith.constant 0 : i32
    %c0_i32_0 = arith.constant 0 : i32
    return %arg0, %c0_i32 : i32, i32
  }
}

</mosaic_0001>

<llo_original>
// kernel: _forward.1
$region0: #{_forward.1}
  #allocation0 [shape = 'u32[]', space=smem, size = 0x4, offset = 0x4, fixed_abs, tag = 'smem constant byte address 0x4 - core index']
  #allocation1 [shape = 'u32[144,128]{1,0:T(1,128)}', space=vmem, size = 0x12000, scoped, tag = 'internal scratch']
  %s0 = inlined_call_operand.vmem [shape: s32[4,64,1], index: 0, kind: input, shape index: {}]
  %s1 = inlined_call_operand.vmem [shape: f32[512,128], index: 1, kind: input, shape index: {}]
  %s2 = inlined_call_operand.vmem [shape: f32[1,128], index: 2, kind: input, shape index: {}]
  %s3 = inlined_call_operand.vmem [shape: f32[8,128], index: 3, kind: input, shape index: {}]
  %s4 = inlined_call_operand.vmem [shape: f32[128,128], index: 4, kind: input, shape index: {}]
  %s5 = inlined_call_operand.vmem [shape: f32[1,128], index: 5, kind: input, shape index: {}]
  %s6 = inlined_call_operand.vmem [shape: f32[8,128], index: 6, kind: output, shape index: {}]
  %s7 = sld [smem:[#allocation0]]
  $region34: #{_forward.1} parent=0
    _
  %s9 = ssub.s32 1, %s7
  %s10 = scalar_select 0, %s9, %s7
  // Predicated region
  $region2: #{_forward.1} parent=0 // pred_check
    _
  $region3: #{_forward.1} parent=0 // pred_check_branch
    %12 = sbr.rel (0) target = $region5
  $region4: #{_forward.1} parent=0 // pred_region
    _
  $region5: #{_forward.1} parent=0 // pred_fallthru
    _
  // Predicated region
  $region6: #{_forward.1} parent=0 // pred_check
    _
  $region7: #{_forward.1} parent=0 // pred_check_branch
    %14 = sbr.rel (0) target = $region9
  $region8: #{_forward.1} parent=0 // pred_region
    _
  $region9: #{_forward.1} parent=0 // pred_fallthru
    _
  // Predicated region
  $region10: #{_forward.1} parent=0 // pred_check
    _
  $region11: #{_forward.1} parent=0 // pred_check_branch
    %16 = sbr.rel (0) target = $region13
  $region12: #{_forward.1} parent=0 // pred_region
    _
  $region13: #{_forward.1} parent=0 // pred_fallthru
    _
  // Predicated region
  $region14: #{_forward.1} parent=0 // pred_check
    _
  $region15: #{_forward.1} parent=0 // pred_check_branch
    %18 = sbr.rel (0) target = $region17
  $region16: #{_forward.1} parent=0 // pred_region
    _
  $region17: #{_forward.1} parent=0 // pred_fallthru
    _
  // Predicated region
  $region18: #{_forward.1} parent=0 // pred_check
    _
  $region19: #{_forward.1} parent=0 // pred_check_branch
    %20 = sbr.rel (0) target = $region21
  $region20: #{_forward.1} parent=0 // pred_region
    _
  $region21: #{_forward.1} parent=0 // pred_fallthru
    _
  // Predicated region
  $region22: #{_forward.1} parent=0 // pred_check
    _
  $region23: #{_forward.1} parent=0 // pred_check_branch
    %22 = sbr.rel (0) target = $region25
  $region24: #{_forward.1} parent=0 // pred_region
    _
  $region25: #{_forward.1} parent=0 // pred_fallthru
    _
  %v23 = vlaneseq
  %v24 = vand.u32 %v23, 127
  %v25 = vld [vmem:[%s0] sm:$0xff]
  %v26 = vld [vmem:[%s0 + $0x8] sm:$0xff]
  %v27 = vld [vmem:[%s0 + $0x10] sm:$0xff]
  %v28 = vld [vmem:[%s0 + $0x18] sm:$0xff]
  %v29 = vld [vmem:[%s0 + $0x20] sm:$0xff]
  %v30 = vld [vmem:[%s0 + $0x28] sm:$0xff]
  %v31 = vld [vmem:[%s0 + $0x30] sm:$0xff]
  %v32 = vld [vmem:[%s0 + $0x38] sm:$0xff]
  %33 = vset.pattern.permute.xlu0 0
  %34 = vperm.xlu0 %33, %v25
  %v35 = vpop.permute.xlu0 %34
  %36 = vset.pattern.permute.xlu0 0
  %37 = vperm.xlu0 %36, %v26
  %v38 = vpop.permute.xlu0 %37
  %39 = vset.pattern.permute.xlu0 0
  %40 = vperm.xlu0 %39, %v27
  %v41 = vpop.permute.xlu0 %40
  %42 = vset.pattern.permute.xlu0 0
  %43 = vperm.xlu0 %42, %v28
  %v44 = vpop.permute.xlu0 %43
  %45 = vset.pattern.permute.xlu0 0
  %46 = vperm.xlu0 %45, %v29
  %v47 = vpop.permute.xlu0 %46
  %48 = vset.pattern.permute.xlu0 0
  %49 = vperm.xlu0 %48, %v30
  %v50 = vpop.permute.xlu0 %49
  %51 = vset.pattern.permute.xlu0 0
  %52 = vperm.xlu0 %51, %v31
  %v53 = vpop.permute.xlu0 %52
  %54 = vset.pattern.permute.xlu0 0
  %55 = vperm.xlu0 %54, %v32
  %v56 = vpop.permute.xlu0 %55
  %vm57 = vcmp.eq.s32.totalorder %v35, %v24
  %vm58 = vcmp.eq.s32.totalorder %v38, %v24
  %vm59 = vcmp.eq.s32.totalorder %v41, %v24
  %vm60 = vcmp.eq.s32.totalorder %v44, %v24
  %vm61 = vcmp.eq.s32.totalorder %v47, %v24
  %vm62 = vcmp.eq.s32.totalorder %v50, %v24
  %vm63 = vcmp.eq.s32.totalorder %v53, %v24
  %vm64 = vcmp.eq.s32.totalorder %v56, %v24
  %v65 = vsel %vm57, 1, 0
  %v66 = vsel %vm58, 1, 0
  %v67 = vsel %vm59, 1, 0
  %v68 = vsel %vm60, 1, 0
  %v69 = vsel %vm61, 1, 0
  %v70 = vsel %vm62, 1, 0
  %v71 = vsel %vm63, 1, 0
  %v72 = vsel %vm64, 1, 0
  %v73 = vcvt.s32.f32 %v65
  %v74 = vcvt.s32.f32 %v66
  %v75 = vcvt.s32.f32 %v67
  %v76 = vcvt.s32.f32 %v68
  %v77 = vcvt.s32.f32 %v69
  %v78 = vcvt.s32.f32 %v70
  %v79 = vcvt.s32.f32 %v71
  %v80 = vcvt.s32.f32 %v72
  %s81 = scalar_lea.vmem %s0, 64
  %v82 = vld [vmem:[%s81] sm:$0xff]
  %v83 = vld [vmem:[%s81 + $0x8] sm:$0xff]
  %v84 = vld [vmem:[%s81 + $0x10] sm:$0xff]
  %v85 = vld [vmem:[%s81 + $0x18] sm:$0xff]
  %v86 = vld [vmem:[%s81 + $0x20] sm:$0xff]
  %v87 = vld [vmem:[%s81 + $0x28] sm:$0xff]
  %v88 = vld [vmem:[%s81 + $0x30] sm:$0xff]
  %v89 = vld [vmem:[%s81 + $0x38] sm:$0xff]
  %90 = vset.pattern.permute.xlu0 0
  %91 = vperm.xlu0 %90, %v82
  %v92 = vpop.permute.xlu0 %91
  %93 = vset.pattern.permute.xlu0 0
  %94 = vperm.xlu0 %93, %v83
  %v95 = vpop.permute.xlu0 %94
  %96 = vset.pattern.permute.xlu0 0
  %97 = vperm.xlu0 %96, %v84
  %v98 = vpop.permute.xlu0 %97
  %99 = vset.pattern.permute.xlu0 0
  %100 = vperm.xlu0 %99, %v85
  %v101 = vpop.permute.xlu0 %100
  %102 = vset.pattern.permute.xlu0 0
  %103 = vperm.xlu0 %102, %v86
  %v104 = vpop.permute.xlu0 %103
  %105 = vset.pattern.permute.xlu0 0
  %106 = vperm.xlu0 %105, %v87
  %v107 = vpop.permute.xlu0 %106
  %108 = vset.pattern.permute.xlu0 0
  %109 = vperm.xlu0 %108, %v88
  %v110 = vpop.permute.xlu0 %109
  %111 = vset.pattern.permute.xlu0 0
  %112 = vperm.xlu0 %111, %v89
  %v113 = vpop.permute.xlu0 %112
  %vm114 = vcmp.eq.s32.totalorder %v92, %v24
  %vm115 = vcmp.eq.s32.totalorder %v95, %v24
  %vm116 = vcmp.eq.s32.totalorder %v98, %v24
  %vm117 = vcmp.eq.s32.totalorder %v101, %v24
  %vm118 = vcmp.eq.s32.totalorder %v104, %v24
  %vm119 = vcmp.eq.s32.totalorder %v107, %v24
  %vm120 = vcmp.eq.s32.totalorder %v110, %v24
  %vm121 = vcmp.eq.s32.totalorder %v113, %v24
  %v122 = vsel %vm114, 1, 0
  %v123 = vsel %vm115, 1, 0
  %v124 = vsel %vm116, 1, 0
  %v125 = vsel %vm117, 1, 0
  %v126 = vsel %vm118, 1, 0
  %v127 = vsel %vm119, 1, 0
  %v128 = vsel %vm120, 1, 0
  %v129 = vsel %vm121, 1, 0
  %v130 = vcvt.s32.f32 %v122
  %v131 = vcvt.s32.f32 %v123
  %v132 = vcvt.s32.f32 %v124
  %v133 = vcvt.s32.f32 %v125
  %v134 = vcvt.s32.f32 %v126
  %v135 = vcvt.s32.f32 %v127
  %v136 = vcvt.s32.f32 %v128
  %v137 = vcvt.s32.f32 %v129
  %s138 = scalar_lea.vmem %s0, 128
  %v139 = vld [vmem:[%s138] sm:$0xff]
  %v140 = vld [vmem:[%s138 + $0x8] sm:$0xff]
  %v141 = vld [vmem:[%s138 + $0x10] sm:$0xff]
  %v142 = vld [vmem:[%s138 + $0x18] sm:$0xff]
  %v143 = vld [vmem:[%s138 + $0x20] sm:$0xff]
  %v144 = vld [vmem:[%s138 + $0x28] sm:$0xff]
  %v145 = vld [vmem:[%s138 + $0x30] sm:$0xff]
  %v146 = vld [vmem:[%s138 + $0x38] sm:$0xff]
  %147 = vset.pattern.permute.xlu0 0
  %148 = vperm.xlu0 %147, %v139
  %v149 = vpop.permute.xlu0 %148
  %150 = vset.pattern.permute.xlu0 0
  %151 = vperm.xlu0 %150, %v140
  %v152 = vpop.permute.xlu0 %151
  %153 = vset.pattern.permute.xlu0 0
  %154 = vperm.xlu0 %153, %v141
  %v155 = vpop.permute.xlu0 %154
  %156 = vset.pattern.permute.xlu0 0
  %157 = vperm.xlu0 %156, %v142
  %v158 = vpop.permute.xlu0 %157
  %159 = vset.pattern.permute.xlu0 0
  %160 = vperm.xlu0 %159, %v143
  %v161 = vpop.permute.xlu0 %160
  %162 = vset.pattern.permute.xlu0 0
  %163 = vperm.xlu0 %162, %v144
  %v164 = vpop.permute.xlu0 %163
  %165 = vset.pattern.permute.xlu0 0
  %166 = vperm.xlu0 %165, %v145
  %v167 = vpop.permute.xlu0 %166
  %168 = vset.pattern.permute.xlu0 0
  %169 = vperm.xlu0 %168, %v146
  %v170 = vpop.permute.xlu0 %169
  %vm171 = vcmp.eq.s32.totalorder %v149, %v24
  %vm172 = vcmp.eq.s32.totalorder %v152, %v24
  %vm173 = vcmp.eq.s32.totalorder %v155, %v24
  %vm174 = vcmp.eq.s32.totalorder %v158, %v24
  %vm175 = vcmp.eq.s32.totalorder %v161, %v24
  %vm176 = vcmp.eq.s32.totalorder %v164, %v24
  %vm177 = vcmp.eq.s32.totalorder %v167, %v24
  %vm178 = vcmp.eq.s32.totalorder %v170, %v24
  %v179 = vsel %vm171, 1, 0
  %v180 = vsel %vm172, 1, 0
  %v181 = vsel %vm173, 1, 0
  %v182 = vsel %vm174, 1, 0
  %v183 = vsel %vm175, 1, 0
  %v184 = vsel %vm176, 1, 0
  %v185 = vsel %vm177, 1, 0
  %v186 = vsel %vm178, 1, 0
  %v187 = vcvt.s32.f32 %v179
  %v188 = vcvt.s32.f32 %v180
  %v189 = vcvt.s32.f32 %v181
  %v190 = vcvt.s32.f32 %v182
  %v191 = vcvt.s32.f32 %v183
  %v192 = vcvt.s32.f32 %v184
  %v193 = vcvt.s32.f32 %v185
  %v194 = vcvt.s32.f32 %v186
  %s195 = scalar_lea.vmem %s0, 192
  %v196 = vld [vmem:[%s195] sm:$0xff]
  %v197 = vld [vmem:[%s195 + $0x8] sm:$0xff]
  %v198 = vld [vmem:[%s195 + $0x10] sm:$0xff]
  %v199 = vld [vmem:[%s195 + $0x18] sm:$0xff]
  %v200 = vld [vmem:[%s195 + $0x20] sm:$0xff]
  %v201 = vld [vmem:[%s195 + $0x28] sm:$0xff]
  %v202 = vld [vmem:[%s195 + $0x30] sm:$0xff]
  %v203 = vld [vmem:[%s195 + $0x38] sm:$0xff]
  %204 = vset.pattern.permute.xlu0 0
  %205 = vperm.xlu0 %204, %v196
  %v206 = vpop.permute.xlu0 %205
  %207 = vset.pattern.permute.xlu0 0
  %208 = vperm.xlu0 %207, %v197
  %v209 = vpop.permute.xlu0 %208
  %210 = vset.pattern.permute.xlu0 0
  %211 = vperm.xlu0 %210, %v198
  %v212 = vpop.permute.xlu0 %211
  %213 = vset.pattern.permute.xlu0 0
  %214 = vperm.xlu0 %213, %v199
  %v215 = vpop.permute.xlu0 %214
  %216 = vset.pattern.permute.xlu0 0
  %217 = vperm.xlu0 %216, %v200
  %v218 = vpop.permute.xlu0 %217
  %219 = vset.pattern.permute.xlu0 0
  %220 = vperm.xlu0 %219, %v201
  %v221 = vpop.permute.xlu0 %220
  %222 = vset.pattern.permute.xlu0 0
  %223 = vperm.xlu0 %222, %v202
  %v224 = vpop.permute.xlu0 %223
  %225 = vset.pattern.permute.xlu0 0
  %226 = vperm.xlu0 %225, %v203
  %v227 = vpop.permute.xlu0 %226
  %vm228 = vcmp.eq.s32.totalorder %v206, %v24
  %vm229 = vcmp.eq.s32.totalorder %v209, %v24
  %vm230 = vcmp.eq.s32.totalorder %v212, %v24
  %vm231 = vcmp.eq.s32.totalorder %v215, %v24
  %vm232 = vcmp.eq.s32.totalorder %v218, %v24
  %vm233 = vcmp.eq.s32.totalorder %v221, %v24
  %vm234 = vcmp.eq.s32.totalorder %v224, %v24
  %vm235 = vcmp.eq.s32.totalorder %v227, %v24
  %v236 = vsel %vm228, 1, 0
  %v237 = vsel %vm229, 1, 0
  %v238 = vsel %vm230, 1, 0
  %v239 = vsel %vm231, 1, 0
  %v240 = vsel %vm232, 1, 0
  %v241 = vsel %vm233, 1, 0
  %v242 = vsel %vm234, 1, 0
  %v243 = vsel %vm235, 1, 0
  %v244 = vcvt.s32.f32 %v236
  %v245 = vcvt.s32.f32 %v237
  %v246 = vcvt.s32.f32 %v238
  %v247 = vcvt.s32.f32 %v239
  %v248 = vcvt.s32.f32 %v240
  %v249 = vcvt.s32.f32 %v241
  %v250 = vcvt.s32.f32 %v242
  %v251 = vcvt.s32.f32 %v243
  %v252 = vld [vmem:[%s1] sm:$0xff]
  %v253 = vld [vmem:[%s1 + $0x8] sm:$0xff]
  %v254 = vld [vmem:[%s1 + $0x10] sm:$0xff]
  %v255 = vld [vmem:[%s1 + $0x18] sm:$0xff]
  %v256 = vld [vmem:[%s1 + $0x20] sm:$0xff]
  %v257 = vld [vmem:[%s1 + $0x28] sm:$0xff]
  %v258 = vld [vmem:[%s1 + $0x30] sm:$0xff]
  %v259 = vld [vmem:[%s1 + $0x38] sm:$0xff]
  %v260 = vld [vmem:[%s1 + $0x40] sm:$0xff]
  %v261 = vld [vmem:[%s1 + $0x48] sm:$0xff]
  %v262 = vld [vmem:[%s1 + $0x50] sm:$0xff]
  %v263 = vld [vmem:[%s1 + $0x58] sm:$0xff]
  %v264 = vld [vmem:[%s1 + $0x60] sm:$0xff]
  %v265 = vld [vmem:[%s1 + $0x68] sm:$0xff]
  %v266 = vld [vmem:[%s1 + $0x70] sm:$0xff]
  %v267 = vld [vmem:[%s1 + $0x78] sm:$0xff]
  %v268 = vld [vmem:[%s1 + $0x80] sm:$0xff]
  %v269 = vld [vmem:[%s1 + $0x88] sm:$0xff]
  %v270 = vld [vmem:[%s1 + $0x90] sm:$0xff]
  %v271 = vld [vmem:[%s1 + $0x98] sm:$0xff]
  %v272 = vld [vmem:[%s1 + $0xa0] sm:$0xff]
  %v273 = vld [vmem:[%s1 + $0xa8] sm:$0xff]
  %v274 = vld [vmem:[%s1 + $0xb0] sm:$0xff]
  %v275 = vld [vmem:[%s1 + $0xb8] sm:$0xff]
  %v276 = vld [vmem:[%s1 + $0xc0] sm:$0xff]
  %v277 = vld [vmem:[%s1 + $0xc8] sm:$0xff]
  %v278 = vld [vmem:[%s1 + $0xd0] sm:$0xff]
  %v279 = vld [vmem:[%s1 + $0xd8] sm:$0xff]
  %v280 = vld [vmem:[%s1 + $0xe0] sm:$0xff]
  %v281 = vld [vmem:[%s1 + $0xe8] sm:$0xff]
  %v282 = vld [vmem:[%s1 + $0xf0] sm:$0xff]
  %v283 = vld [vmem:[%s1 + $0xf8] sm:$0xff]
  %v284 = vld [vmem:[%s1 + $0x100] sm:$0xff]
  %v285 = vld [vmem:[%s1 + $0x108] sm:$0xff]
  %v286 = vld [vmem:[%s1 + $0x110] sm:$0xff]
  %v287 = vld [vmem:[%s1 + $0x118] sm:$0xff]
  %v288 = vld [vmem:[%s1 + $0x120] sm:$0xff]
  %v289 = vld [vmem:[%s1 + $0x128] sm:$0xff]
  %v290 = vld [vmem:[%s1 + $0x130] sm:$0xff]
  %v291 = vld [vmem:[%s1 + $0x138] sm:$0xff]
  %v292 = vld [vmem:[%s1 + $0x140] sm:$0xff]
  %v293 = vld [vmem:[%s1 + $0x148] sm:$0xff]
  %v294 = vld [vmem:[%s1 + $0x150] sm:$0xff]
  %v295 = vld [vmem:[%s1 + $0x158] sm:$0xff]
  %v296 = vld [vmem:[%s1 + $0x160] sm:$0xff]
  %v297 = vld [vmem:[%s1 + $0x168] sm:$0xff]
  %v298 = vld [vmem:[%s1 + $0x170] sm:$0xff]
  %v299 = vld [vmem:[%s1 + $0x178] sm:$0xff]
  %v300 = vld [vmem:[%s1 + $0x180] sm:$0xff]
  %v301 = vld [vmem:[%s1 + $0x188] sm:$0xff]
  %v302 = vld [vmem:[%s1 + $0x190] sm:$0xff]
  %v303 = vld [vmem:[%s1 + $0x198] sm:$0xff]
  %v304 = vld [vmem:[%s1 + $0x1a0] sm:$0xff]
  %v305 = vld [vmem:[%s1 + $0x1a8] sm:$0xff]
  %v306 = vld [vmem:[%s1 + $0x1b0] sm:$0xff]
  %v307 = vld [vmem:[%s1 + $0x1b8] sm:$0xff]
  %v308 = vld [vmem:[%s1 + $0x1c0] sm:$0xff]
  %v309 = vld [vmem:[%s1 + $0x1c8] sm:$0xff]
  %v310 = vld [vmem:[%s1 + $0x1d0] sm:$0xff]
  %v311 = vld [vmem:[%s1 + $0x1d8] sm:$0xff]
  %v312 = vld [vmem:[%s1 + $0x1e0] sm:$0xff]
  %v313 = vld [vmem:[%s1 + $0x1e8] sm:$0xff]
  %v314 = vld [vmem:[%s1 + $0x1f0] sm:$0xff]
  %v315 = vld [vmem:[%s1 + $0x1f8] sm:$0xff]
  %316 = vmatprep.subr.mxu0 0.0
  %317 = vmatpush1.msra.mxu0 %v252
  %318 = vmatprep.subr.mxu0 0.0
  %319 = vmatpush1.msra.mxu0 %v253
  %320 = vmatprep.subr.mxu0 0.0
  %321 = vmatpush1.msra.mxu0 %v254
  %322 = vmatprep.subr.mxu0 0.0
  %323 = vmatpush1.msra.mxu0 %v255
  %324 = vmatprep.subr.mxu0 0.0
  %325 = vmatpush1.msra.mxu0 %v256
  %326 = vmatprep.subr.mxu0 0.0
  %327 = vmatpush1.msra.mxu0 %v257
  %328 = vmatprep.subr.mxu0 0.0
  %329 = vmatpush1.msra.mxu0 %v258
  %330 = vmatprep.subr.mxu0 0.0
  %331 = vmatpush1.msra.mxu0 %v259
  %332 = vmatprep.subr.mxu0 0.0
  %333 = vmatpush1.msra.mxu0 %v260
  %334 = vmatprep.subr.mxu0 0.0
  %335 = vmatpush1.msra.mxu0 %v261
  %336 = vmatprep.subr.mxu0 0.0
  %337 = vmatpush1.msra.mxu0 %v262
  %338 = vmatprep.subr.mxu0 0.0
  %339 = vmatpush1.msra.mxu0 %v263
  %340 = vmatprep.subr.mxu0 0.0
  %341 = vmatpush1.msra.mxu0 %v264
  %342 = vmatprep.subr.mxu0 0.0
  %343 = vmatpush1.msra.mxu0 %v265
  %344 = vmatprep.subr.mxu0 0.0
  %345 = vmatpush1.msra.mxu0 %v266
  %346 = vmatprep.subr.mxu0 0.0
  %347 = vmatpush1.msra.mxu0 %v267
  %348 = vmatprep.subr.mxu0 0.0
  %349 = vmatpush1.msra.mxu0 %v268
  %350 = vmatprep.subr.mxu0 0.0
  %351 = vmatpush1.msra.mxu0 %v269
  %352 = vmatprep.subr.mxu0 0.0
  %353 = vmatpush1.msra.mxu0 %v270
  %354 = vmatprep.subr.mxu0 0.0
  %355 = vmatpush1.msra.mxu0 %v271
  %356 = vmatprep.subr.mxu0 0.0
  %357 = vmatpush1.msra.mxu0 %v272
  %358 = vmatprep.subr.mxu0 0.0
  %359 = vmatpush1.msra.mxu0 %v273
  %360 = vmatprep.subr.mxu0 0.0
  %361 = vmatpush1.msra.mxu0 %v274
  %362 = vmatprep.subr.mxu0 0.0
  %363 = vmatpush1.msra.mxu0 %v275
  %364 = vmatprep.subr.mxu0 0.0
  %365 = vmatpush1.msra.mxu0 %v276
  %366 = vmatprep.subr.mxu0 0.0
  %367 = vmatpush1.msra.mxu0 %v277
  %368 = vmatprep.subr.mxu0 0.0
  %369 = vmatpush1.msra.mxu0 %v278
  %370 = vmatprep.subr.mxu0 0.0
  %371 = vmatpush1.msra.mxu0 %v279
  %372 = vmatprep.subr.mxu0 0.0
  %373 = vmatpush1.msra.mxu0 %v280
  %374 = vmatprep.subr.mxu0 0.0
  %375 = vmatpush1.msra.mxu0 %v281
  %376 = vmatprep.subr.mxu0 0.0
  %377 = vmatpush1.msra.mxu0 %v282
  %378 = vmatprep.subr.mxu0 0.0
  %379 = vmatpush1.msra.mxu0 %v283
  %380 = vmatprep.mubr.f32.mxu0 %v130
  %381 = vmatmul.mubr.f32.gmra.mrb[0].mxu0 %v73
  %v382 = vpop.f32.mrb[0].mxu0
  %v383 = vadd.f32 0.0, %v382
  %v384 = vpop.f32.mrb[0].mxu0
  %385 = vmatprep.mubr.f32.mxu0 %v131
  %386 = vmatmul.mubr.f32.gmra.mrb[0].mxu0 %v74
  %v387 = vpop.f32.mrb[0].mxu0
  %v388 = vadd.f32 0.0, %v387
  %v389 = vpop.f32.mrb[0].mxu0
  %390 = vmatprep.mubr.f32.mxu0 %v132
  %391 = vmatmul.mubr.f32.gmra.mrb[0].mxu0 %v75
  %v392 = vpop.f32.mrb[0].mxu0
  %v393 = vadd.f32 0.0, %v392
  %v394 = vpop.f32.mrb[0].mxu0
  %395 = vmatprep.mubr.f32.mxu0 %v133
  %396 = vmatmul.mubr.f32.gmra.mrb[0].mxu0 %v76
  %v397 = vpop.f32.mrb[0].mxu0
  %v398 = vadd.f32 0.0, %v397
  %v399 = vpop.f32.mrb[0].mxu0
  %400 = vmatprep.mubr.f32.mxu0 %v134
  %401 = vmatmul.mubr.f32.gmra.mrb[0].mxu0 %v77
  %v402 = vpop.f32.mrb[0].mxu0
  %v403 = vadd.f32 0.0, %v402
  %v404 = vpop.f32.mrb[0].mxu0
  %405 = vmatprep.mubr.f32.mxu0 %v135
  %406 = vmatmul.mubr.f32.gmra.mrb[0].mxu0 %v78
  %v407 = vpop.f32.mrb[0].mxu0
  %v408 = vadd.f32 0.0, %v407
  %v409 = vpop.f32.mrb[0].mxu0
  %410 = vmatprep.mubr.f32.mxu0 %v136
  %411 = vmatmul.mubr.f32.gmra.mrb[0].mxu0 %v79
  %v412 = vpop.f32.mrb[0].mxu0
  %v413 = vadd.f32 0.0, %v412
  %v414 = vpop.f32.mrb[0].mxu0
  %415 = vmatprep.mubr.f32.mxu0 %v137
  %416 = vmatmul.mubr.f32.gmra.mrb[0].mxu0 %v80
  %v417 = vpop.f32.mrb[0].mxu0
  %v418 = vadd.f32 0.0, %v417
  %v419 = vpop.f32.mrb[0].mxu0
  %420 = vdwg.mxu0
  %421 = vmatprep.subr.mxu0 0.0
  %422 = vmatpush1.msra.mxu0 %v284
  %423 = vmatprep.subr.mxu0 0.0
  %424 = vmatpush1.msra.mxu0 %v285
  %425 = vmatprep.subr.mxu0 0.0
  %426 = vmatpush1.msra.mxu0 %v286
  %427 = vmatprep.subr.mxu0 0.0
  %428 = vmatpush1.msra.mxu0 %v287
  %429 = vmatprep.subr.mxu0 0.0
  %430 = vmatpush1.msra.mxu0 %v288
  %431 = vmatprep.subr.mxu0 0.0
  %432 = vmatpush1.msra.mxu0 %v289
  %433 = vmatprep.subr.mxu0 0.0
  %434 = vmatpush1.msra.mxu0 %v290
  %435 = vmatprep.subr.mxu0 0.0
  %436 = vmatpush1.msra.mxu0 %v291
  %437 = vmatprep.subr.mxu0 0.0
  %438 = vmatpush1.msra.mxu0 %v292
  %439 = vmatprep.subr.mxu0 0.0
  %440 = vmatpush1.msra.mxu0 %v293
  %441 = vmatprep.subr.mxu0 0.0
  %442 = vmatpush1.msra.mxu0 %v294
  %443 = vmatprep.subr.mxu0 0.0
  %444 = vmatpush1.msra.mxu0 %v295
  %445 = vmatprep.subr.mxu0 0.0
  %446 = vmatpush1.msra.mxu0 %v296
  %447 = vmatprep.subr.mxu0 0.0
  %448 = vmatpush1.msra.mxu0 %v297
  %449 = vmatprep.subr.mxu0 0.0
  %450 = vmatpush1.msra.mxu0 %v298
  %451 = vmatprep.subr.mxu0 0.0
  %452 = vmatpush1.msra.mxu0 %v299
  %453 = vmatprep.subr.mxu0 0.0
  %454 = vmatpush1.msra.mxu0 %v300
  %455 = vmatprep.subr.mxu0 0.0
  %456 = vmatpush1.msra.mxu0 %v301
  %457 = vmatprep.subr.mxu0 0.0
  %458 = vmatpush1.msra.mxu0 %v302
  %459 = vmatprep.subr.mxu0 0.0
  %460 = vmatpush1.msra.mxu0 %v303
  %461 = vmatprep.subr.mxu0 0.0
  %462 = vmatpush1.msra.mxu0 %v304
  %463 = vmatprep.subr.mxu0 0.0
  %464 = vmatpush1.msra.mxu0 %v305
  %465 = vmatprep.subr.mxu0 0.0
  %466 = vmatpush1.msra.mxu0 %v306
  %467 = vmatprep.subr.mxu0 0.0
  %468 = vmatpush1.msra.mxu0 %v307
  %469 = vmatprep.subr.mxu0 0.0
  %470 = vmatpush1.msra.mxu0 %v308
  %471 = vmatprep.subr.mxu0 0.0
  %472 = vmatpush1.msra.mxu0 %v309
  %473 = vmatprep.subr.mxu0 0.0
  %474 = vmatpush1.msra.mxu0 %v310
  %475 = vmatprep.subr.mxu0 0.0
  %476 = vmatpush1.msra.mxu0 %v311
  %477 = vmatprep.subr.mxu0 0.0
  %478 = vmatpush1.msra.mxu0 %v312
  %479 = vmatprep.subr.mxu0 0.0
  %480 = vmatpush1.msra.mxu0 %v313
  %481 = vmatprep.subr.mxu0 0.0
  %482 = vmatpush1.msra.mxu0 %v314
  %483 = vmatprep.subr.mxu0 0.0
  %484 = vmatpush1.msra.mxu0 %v315
  %485 = vmatprep.mubr.f32.mxu0 %v244
  %486 = vmatmul.mubr.f32.gmra.mrb[0].mxu0 %v187
  %v487 = vpop.f32.mrb[0].mxu0
  %v488 = vadd.f32 %v383, %v487
  %v489 = vpop.f32.mrb[0].mxu0
  %490 = vmatprep.mubr.f32.mxu0 %v245
  %491 = vmatmul.mubr.f32.gmra.mrb[0].mxu0 %v188
  %v492 = vpop.f32.mrb[0].mxu0
  %v493 = vadd.f32 %v388, %v492
  %v494 = vpop.f32.mrb[0].mxu0
  %495 = vmatprep.mubr.f32.mxu0 %v246
  %496 = vmatmul.mubr.f32.gmra.mrb[0].mxu0 %v189
  %v497 = vpop.f32.mrb[0].mxu0
  %v498 = vadd.f32 %v393, %v497
  %v499 = vpop.f32.mrb[0].mxu0
  %500 = vmatprep.mubr.f32.mxu0 %v247
  %501 = vmatmul.mubr.f32.gmra.mrb[0].mxu0 %v190
  %v502 = vpop.f32.mrb[0].mxu0
  %v503 = vadd.f32 %v398, %v502
  %v504 = vpop.f32.mrb[0].mxu0
  %505 = vmatprep.mubr.f32.mxu0 %v248
  %506 = vmatmul.mubr.f32.gmra.mrb[0].mxu0 %v191
  %v507 = vpop.f32.mrb[0].mxu0
  %v508 = vadd.f32 %v403, %v507
  %v509 = vpop.f32.mrb[0].mxu0
  %510 = vmatprep.mubr.f32.mxu0 %v249
  %511 = vmatmul.mubr.f32.gmra.mrb[0].mxu0 %v192
  %v512 = vpop.f32.mrb[0].mxu0
  %v513 = vadd.f32 %v408, %v512
  %v514 = vpop.f32.mrb[0].mxu0
  %515 = vmatprep.mubr.f32.mxu0 %v250
  %516 = vmatmul.mubr.f32.gmra.mrb[0].mxu0 %v193
  %v517 = vpop.f32.mrb[0].mxu0
  %v518 = vadd.f32 %v413, %v517
  %v519 = vpop.f32.mrb[0].mxu0
  %520 = vmatprep.mubr.f32.mxu0 %v251
  %521 = vmatmul.mubr.f32.gmra.mrb[0].mxu0 %v194
  %v522 = vpop.f32.mrb[0].mxu0
  %v523 = vadd.f32 %v418, %v522
  %v524 = vpop.f32.mrb[0].mxu0
  %525 = vdwg.mxu0
  %v526 = vld [vmem:[%s2] sm:$0x1]
  %v528 = vlaneseq
  %v529 = vshrl.u32 %v528, 7
  %v530 = vsub.s32 0, %v529
  %v531 = vrot.slane %v526, %v530
  %v533 = vadd.f32 %v488, %v531
  %v534 = vadd.f32 %v493, %v531
  %v535 = vadd.f32 %v498, %v531
  %v536 = vadd.f32 %v503, %v531
  %v537 = vadd.f32 %v508, %v531
  %v538 = vadd.f32 %v513, %v531
  %v539 = vadd.f32 %v518, %v531
  %v540 = vadd.f32 %v523, %v531
  %v541 = vmax.f32 %v533, 0.0
  %v542 = vmax.f32 %v534, 0.0
  %v543 = vmax.f32 %v535, 0.0
  %v544 = vmax.f32 %v536, 0.0
  %v545 = vmax.f32 %v537, 0.0
  %v546 = vmax.f32 %v538, 0.0
  %v547 = vmax.f32 %v539, 0.0
  %v548 = vmax.f32 %v540, 0.0
  %v549 = vld [vmem:[%s3] sm:$0xff]
  %v550 = vadd.f32 %v541, %v549
  %v551 = vadd.f32 %v542, %v549
  %v552 = vadd.f32 %v543, %v549
  %v553 = vadd.f32 %v544, %v549
  %v554 = vadd.f32 %v545, %v549
  %v555 = vadd.f32 %v546, %v549
  %v556 = vadd.f32 %v547, %v549
  %v557 = vadd.f32 %v548, %v549
  %v558 = vrot.slane %v550, 4
  %v559 = vmax.f32 %v550, %v558
  %v560 = vrot.slane %v559, 2
  %v561 = vmax.f32 %v559, %v560
  %v562 = vrot.slane %v561, 1
  %v563 = vmax.f32 %v561, %v562
  %v564 = vrot.slane %v551, 4
  %v565 = vmax.f32 %v551, %v564
  %v566 = vrot.slane %v565, 2
  %v567 = vmax.f32 %v565, %v566
  %v568 = vrot.slane %v567, 1
  %v569 = vmax.f32 %v567, %v568
  %v570 = vrot.slane %v552, 4
  %v571 = vmax.f32 %v552, %v570
  %v572 = vrot.slane %v571, 2
  %v573 = vmax.f32 %v571, %v572
  %v574 = vrot.slane %v573, 1
  %v575 = vmax.f32 %v573, %v574
  %v576 = vrot.slane %v553, 4
  %v577 = vmax.f32 %v553, %v576
  %v578 = vrot.slane %v577, 2
  %v579 = vmax.f32 %v577, %v578
  %v580 = vrot.slane %v579, 1
  %v581 = vmax.f32 %v579, %v580
  %v582 = vrot.slane %v554, 4
  %v583 = vmax.f32 %v554, %v582
  %v584 = vrot.slane %v583, 2
  %v585 = vmax.f32 %v583, %v584
  %v586 = vrot.slane %v585, 1
  %v587 = vmax.f32 %v585, %v586
  %v588 = vrot.slane %v555, 4
  %v589 = vmax.f32 %v555, %v588
  %v590 = vrot.slane %v589, 2
  %v591 = vmax.f32 %v589, %v590
  %v592 = vrot.slane %v591, 1
  %v593 = vmax.f32 %v591, %v592
  %v594 = vrot.slane %v556, 4
  %v595 = vmax.f32 %v556, %v594
  %v596 = vrot.slane %v595, 2
  %v597 = vmax.f32 %v595, %v596
  %v598 = vrot.slane %v597, 1
  %v599 = vmax.f32 %v597, %v598
  %v600 = vrot.slane %v557, 4
  %v601 = vmax.f32 %v557, %v600
  %v602 = vrot.slane %v601, 2
  %v603 = vmax.f32 %v601, %v602
  %v604 = vrot.slane %v603, 1
  %v605 = vmax.f32 %v603, %v604
  %v606 = vld [vmem:[%s4] sm:$0xff]
  %v607 = vld [vmem:[%s4 + $0x8] sm:$0xff]
  %v608 = vld [vmem:[%s4 + $0x10] sm:$0xff]
  %v609 = vld [vmem:[%s4 + $0x18] sm:$0xff]
  %v610 = vld [vmem:[%s4 + $0x20] sm:$0xff]
  %v611 = vld [vmem:[%s4 + $0x28] sm:$0xff]
  %v612 = vld [vmem:[%s4 + $0x30] sm:$0xff]
  %v613 = vld [vmem:[%s4 + $0x38] sm:$0xff]
  %v614 = vld [vmem:[%s4 + $0x40] sm:$0xff]
  %v615 = vld [vmem:[%s4 + $0x48] sm:$0xff]
  %v616 = vld [vmem:[%s4 + $0x50] sm:$0xff]
  %v617 = vld [vmem:[%s4 + $0x58] sm:$0xff]
  %v618 = vld [vmem:[%s4 + $0x60] sm:$0xff]
  %v619 = vld [vmem:[%s4 + $0x68] sm:$0xff]
  %v620 = vld [vmem:[%s4 + $0x70] sm:$0xff]
  %v621 = vld [vmem:[%s4 + $0x78] sm:$0xff]
  %v622 = vld [vmem:[%s5] sm:$0x1]
  %v624 = vlaneseq
  %v625 = vshrl.u32 %v624, 7
  %v626 = vsub.s32 0, %v625
  %v627 = vrot.slane %v622, %v626
  %vm637 = vcmask 1041409
  %v638 = vsel %vm637, %v569, %v563
  %vm639 = vcmask 1042434
  %v640 = vsel %vm639, %v575, %v638
  %vm641 = vcmask 1043459
  %v642 = vsel %vm641, %v581, %v640
  %vm643 = vcmask 1044484
  %v644 = vsel %vm643, %v587, %v642
  %vm645 = vcmask 1045509
  %v646 = vsel %vm645, %v593, %v644
  %vm647 = vcmask 1046534
  %v648 = vsel %vm647, %v599, %v646
  %vm649 = vcmask 1047559
  %v650 = vsel %vm649, %v605, %v648
  %652 = vmatprep.subr.mxu0 0.0
  %653 = vmatpush1.msra.mxu0 %v606
  %654 = vmatprep.subr.mxu0 0.0
  %655 = vmatpush1.msra.mxu0 %v607
  %656 = vmatprep.subr.mxu0 0.0
  %657 = vmatpush1.msra.mxu0 %v608
  %658 = vmatprep.subr.mxu0 0.0
  %659 = vmatpush1.msra.mxu0 %v609
  %660 = vmatprep.subr.mxu0 0.0
  %661 = vmatpush1.msra.mxu0 %v610
  %662 = vmatprep.subr.mxu0 0.0
  %663 = vmatpush1.msra.mxu0 %v611
  %664 = vmatprep.subr.mxu0 0.0
  %665 = vmatpush1.msra.mxu0 %v612
  %666 = vmatprep.subr.mxu0 0.0
  %667 = vmatpush1.msra.mxu0 %v613
  %668 = vmatprep.subr.mxu0 0.0
  %669 = vmatpush1.msra.mxu0 %v614
  %670 = vmatprep.subr.mxu0 0.0
  %671 = vmatpush1.msra.mxu0 %v615
  %672 = vmatprep.subr.mxu0 0.0
  %673 = vmatpush1.msra.mxu0 %v616
  %674 = vmatprep.subr.mxu0 0.0
  %675 = vmatpush1.msra.mxu0 %v617
  %676 = vmatprep.subr.mxu0 0.0
  %677 = vmatpush1.msra.mxu0 %v618
  %678 = vmatprep.subr.mxu0 0.0
  %679 = vmatpush1.msra.mxu0 %v619
  %680 = vmatprep.subr.mxu0 0.0
  %681 = vmatpush1.msra.mxu0 %v620
  %682 = vmatprep.subr.mxu0 0.0
  %683 = vmatpush1.msra.mxu0 %v621
  %684 = vmatprep.subr.mxu0 0.0
  %685 = vmatpush1.msra.mxu0 0.0
  %686 = vmatprep.subr.mxu0 0.0
  %687 = vmatpush1.msra.mxu0 0.0
  %688 = vmatprep.subr.mxu0 0.0
  %689 = vmatpush1.msra.mxu0 0.0
  %690 = vmatprep.subr.mxu0 0.0
  %691 = vmatpush1.msra.mxu0 0.0
  %692 = vmatprep.subr.mxu0 0.0
  %693 = vmatpush1.msra.mxu0 0.0
  %694 = vmatprep.subr.mxu0 0.0
  %695 = vmatpush1.msra.mxu0 0.0
  %696 = vmatprep.subr.mxu0 0.0
  %697 = vmatpush1.msra.mxu0 0.0
  %698 = vmatprep.subr.mxu0 0.0
  %699 = vmatpush1.msra.mxu0 0.0
  %700 = vmatprep.subr.mxu0 0.0
  %701 = vmatpush1.msra.mxu0 0.0
  %702 = vmatprep.subr.mxu0 0.0
  %703 = vmatpush1.msra.mxu0 0.0
  %704 = vmatprep.subr.mxu0 0.0
  %705 = vmatpush1.msra.mxu0 0.0
  %706 = vmatprep.subr.mxu0 0.0
  %707 = vmatpush1.msra.mxu0 0.0
  %708 = vmatprep.subr.mxu0 0.0
  %709 = vmatpush1.msra.mxu0 0.0
  %710 = vmatprep.subr.mxu0 0.0
  %711 = vmatpush1.msra.mxu0 0.0
  %712 = vmatprep.subr.mxu0 0.0
  %713 = vmatpush1.msra.mxu0 0.0
  %714 = vmatprep.subr.mxu0 0.0
  %715 = vmatpush1.msra.mxu0 0.0
  %716 = vmatprep.mubr.f32.mxu0 0.0
  %717 = vmatmul.mubr.f32.gmra.mrb[0].mxu0 %v650
  %v718 = vpop.f32.mrb[0].mxu0
  %v719 = vadd.f32 %v627, %v718
  %v720 = vpop.f32.mrb[0].mxu0
  %721 = vdwg.mxu0
  %722 = vst [vmem:[%s6] sm:$0xff] %v719
  // Predicated region
  $region26: #{_forward.1} parent=0 // pred_check
    _
  $region27: #{_forward.1} parent=0 // pred_check_branch
    %724 = sbr.rel (0) target = $region29
  $region28: #{_forward.1} parent=0 // pred_region
    _
  $region29: #{_forward.1} parent=0 // pred_fallthru
    _
  // Predicated region
  $region30: #{_forward.1} parent=0 // pred_check
    _
  $region31: #{_forward.1} parent=0 // pred_check_branch
    %726 = sbr.rel (0) target = $region33
  $region32: #{_forward.1} parent=0 // pred_region
    _
  $region33: #{_forward.1} parent=0 // pred_fallthru
    _

// kernel: _forward.1
$region0: #{_forward.1}
  #allocation0 [shape = 'u32[]', space=smem, size = 0x4, offset = 0x4, fixed_abs, tag = 'smem constant byte address 0x4 - core index']
  #allocation1 [shape = 'u32[144,128]{1,0:T(1,128)}', space=vmem, size = 0x12000, scoped, tag = 'internal scratch']
  %s0 = inlined_call_operand.vmem [shape: s32[4,64,1], index: 0, kind: input, shape index: {}]
  %s1 = inlined_call_operand.vmem [shape: f32[512,128], index: 1, kind: input, shape index: {}]
  %s2 = inlined_call_operand.vmem [shape: f32[1,128], index: 2, kind: input, shape index: {}]
  %s3 = inlined_call_operand.vmem [shape: f32[8,128], index: 3, kind: input, shape index: {}]
  %s4 = inlined_call_operand.vmem [shape: f32[128,128], index: 4, kind: input, shape index: {}]
  %s5 = inlined_call_operand.vmem [shape: f32[1,128], index: 5, kind: input, shape index: {}]
  %s6 = inlined_call_operand.vmem [shape: f32[8,128], index: 6, kind: output, shape index: {}]
  %s7 = sld [smem:[#allocation0]]
  $region34: #{_forward.1} parent=0
    _
  %s9 = ssub.s32 1, %s7
  %s10 = scalar_select 0, %s9, %s7
  // Predicated region
  $region2: #{_forward.1} parent=0 // pred_check
    _
  $region3: #{_forward.1} parent=0 // pred_check_branch
    %12 = sbr.rel (0) target = $region5
  $region4: #{_forward.1} parent=0 // pred_region
    _
  $region5: #{_forward.1} parent=0 // pred_fallthru
    _
  // Predicated region
  $region6: #{_forward.1} parent=0 // pred_check
    _
  $region7: #{_forward.1} parent=0 // pred_check_branch
    %14 = sbr.rel (0) target = $region9
  $region8: #{_forward.1} parent=0 // pred_region
    _
  $region9: #{_forward.1} parent=0 // pred_fallthru
    _
  // Predicated region
  $region10: #{_forward.1} parent=0 // pred_check
    _
  $region11: #{_forward.1} parent=0 // pred_check_branch
    %16 = sbr.rel (0) target = $region13
  $region12: #{_forward.1} parent=0 // pred_region
    _
  $region13: #{_forward.1} parent=0 // pred_fallthru
    _
  // Predicated region
  $region14: #{_forward.1} parent=0 // pred_check
    _
  $region15: #{_forward.1} parent=0 // pred_check_branch
    %18 = sbr.rel (0) target = $region17
  $region16: #{_forward.1} parent=0 // pred_region
    _
  $region17: #{_forward.1} parent=0 // pred_fallthru
    _
  // Predicated region
  $region18: #{_forward.1} parent=0 // pred_check
    _
  $region19: #{_forward.1} parent=0 // pred_check_branch
    %20 = sbr.rel (0) target = $region21
  $region20: #{_forward.1} parent=0 // pred_region
    _
  $region21: #{_forward.1} parent=0 // pred_fallthru
    _
  // Predicated region
  $region22: #{_forward.1} parent=0 // pred_check
    _
  $region23: #{_forward.1} parent=0 // pred_check_branch
    %22 = sbr.rel (0) target = $region25
  $region24: #{_forward.1} parent=0 // pred_region
    _
  $region25: #{_forward.1} parent=0 // pred_fallthru
    _
  %v23 = vlaneseq
  %v24 = vand.u32 %v23, 127
  %v25 = vld [vmem:[%s0] sm:$0xff]
  %v26 = vld [vmem:[%s0 + $0x8] sm:$0xff]
  %v27 = vld [vmem:[%s0 + $0x10] sm:$0xff]
  %v28 = vld [vmem:[%s0 + $0x18] sm:$0xff]
  %v29 = vld [vmem:[%s0 + $0x20] sm:$0xff]
  %v30 = vld [vmem:[%s0 + $0x28] sm:$0xff]
  %v31 = vld [vmem:[%s0 + $0x30] sm:$0xff]
  %v32 = vld [vmem:[%s0 + $0x38] sm:$0xff]
  %33 = vset.pattern.permute.xlu0 0
  %34 = vperm.xlu0 %33, %v25
  %v35 = vpop.permute.xlu0 %34
  %36 = vset.pattern.permute.xlu0 0
  %37 = vperm.xlu0 %36, %v26
  %v38 = vpop.permute.xlu0 %37
  %39 = vset.pattern.permute.xlu0 0
  %40 = vperm.xlu0 %39, %v27
  %v41 = vpop.permute.xlu0 %40
  %42 = vset.pattern.permute.xlu0 0
  %43 = vperm.xlu0 %42, %v28
  %v44 = vpop.permute.xlu0 %43
  %45 = vset.pattern.permute.xlu0 0
  %46 = vperm.xlu0 %45, %v29
  %v47 = vpop.permute.xlu0 %46
  %48 = vset.pattern.permute.xlu0 0
  %49 = vperm.xlu0 %48, %v30
  %v50 = vpop.permute.xlu0 %49
  %51 = vset.pattern.permute.xlu0 0
  %52 = vperm.xlu0 %51, %v31
  %v53 = vpop.permute.xlu0 %52
  %54 = vset.pattern.permute.xlu0 0
  %55 = vperm.xlu0 %54, %v32
  %v56 = vpop.permute.xlu0 %55
  %vm57 = vcmp.eq.s32.totalorder %v35, %v24
  %vm58 = vcmp.eq.s32.totalorder %v38, %v24
  %vm59 = vcmp.eq.s32.totalorder %v41, %v24
  %vm60 = vcmp.eq.s32.totalorder %v44, %v24
  %vm61 = vcmp.eq.s32.totalorder %v47, %v24
  %vm62 = vcmp.eq.s32.totalorder %v50, %v24
  %vm63 = vcmp.eq.s32.totalorder %v53, %v24
  %vm64 = vcmp.eq.s32.totalorder %v56, %v24
  %v65 = vsel %vm57, 1, 0
  %v66 = vsel %vm58, 1, 0
  %v67 = vsel %vm59, 1, 0
  %v68 = vsel %vm60, 1, 0
  %v69 = vsel %vm61, 1, 0
  %v70 = vsel %vm62, 1, 0
  %v71 = vsel %vm63, 1, 0
  %v72 = vsel %vm64, 1, 0
  %v73 = vcvt.s32.f32 %v65
  %v74 = vcvt.s32.f32 %v66
  %v75 = vcvt.s32.f32 %v67
  %v76 = vcvt.s32.f32 %v68
  %v77 = vcvt.s32.f32 %v69
  %v78 = vcvt.s32.f32 %v70
  %v79 = vcvt.s32.f32 %v71
  %v80 = vcvt.s32.f32 %v72
  %s81 = scalar_lea.vmem %s0, 64
  %v82 = vld [vmem:[%s81] sm:$0xff]
  %v83 = vld [vmem:[%s81 + $0x8] sm:$0xff]
  %v84 = vld [vmem:[%s81 + $0x10] sm:$0xff]
  %v85 = vld [vmem:[%s81 + $0x18] sm:$0xff]
  %v86 = vld [vmem:[%s81 + $0x20] sm:$0xff]
  %v87 = vld [vmem:[%s81 + $0x28] sm:$0xff]
  %v88 = vld [vmem:[%s81 + $0x30] sm:$0xff]
  %v89 = vld [vmem:[%s81 + $0x38] sm:$0xff]
  %90 = vset.pattern.permute.xlu0 0
  %91 = vperm.xlu0 %90, %v82
  %v92 = vpop.permute.xlu0 %91
  %93 = vset.pattern.permute.xlu0 0
  %94 = vperm.xlu0 %93, %v83
  %v95 = vpop.permute.xlu0 %94
  %96 = vset.pattern.permute.xlu0 0
  %97 = vperm.xlu0 %96, %v84
  %v98 = vpop.permute.xlu0 %97
  %99 = vset.pattern.permute.xlu0 0
  %100 = vperm.xlu0 %99, %v85
  %v101 = vpop.permute.xlu0 %100
  %102 = vset.pattern.permute.xlu0 0
  %103 = vperm.xlu0 %102, %v86
  %v104 = vpop.permute.xlu0 %103
  %105 = vset.pattern.permute.xlu0 0
  %106 = vperm.xlu0 %105, %v87
  %v107 = vpop.permute.xlu0 %106
  %108 = vset.pattern.permute.xlu0 0
  %109 = vperm.xlu0 %108, %v88
  %v110 = vpop.permute.xlu0 %109
  %111 = vset.pattern.permute.xlu0 0
  %112 = vperm.xlu0 %111, %v89
  %v113 = vpop.permute.xlu0 %112
  %vm114 = vcmp.eq.s32.totalorder %v92, %v24
  %vm115 = vcmp.eq.s32.totalorder %v95, %v24
  %vm116 = vcmp.eq.s32.totalorder %v98, %v24
  %vm117 = vcmp.eq.s32.totalorder %v101, %v24
  %vm118 = vcmp.eq.s32.totalorder %v104, %v24
  %vm119 = vcmp.eq.s32.totalorder %v107, %v24
  %vm120 = vcmp.eq.s32.totalorder %v110, %v24
  %vm121 = vcmp.eq.s32.totalorder %v113, %v24
  %v122 = vsel %vm114, 1, 0
  %v123 = vsel %vm115, 1, 0
  %v124 = vsel %vm116, 1, 0
  %v125 = vsel %vm117, 1, 0
  %v126 = vsel %vm118, 1, 0
  %v127 = vsel %vm119, 1, 0
  %v128 = vsel %vm120, 1, 0
  %v129 = vsel %vm121, 1, 0
  %v130 = vcvt.s32.f32 %v122
  %v131 = vcvt.s32.f32 %v123
  %v132 = vcvt.s32.f32 %v124
  %v133 = vcvt.s32.f32 %v125
  %v134 = vcvt.s32.f32 %v126
  %v135 = vcvt.s32.f32 %v127
  %v136 = vcvt.s32.f32 %v128
  %v137 = vcvt.s32.f32 %v129
  %s138 = scalar_lea.vmem %s0, 128
  %v139 = vld [vmem:[%s138] sm:$0xff]
  %v140 = vld [vmem:[%s138 + $0x8] sm:$0xff]
  %v141 = vld [vmem:[%s138 + $0x10] sm:$0xff]
  %v142 = vld [vmem:[%s138 + $0x18] sm:$0xff]
  %v143 = vld [vmem:[%s138 + $0x20] sm:$0xff]
  %v144 = vld [vmem:[%s138 + $0x28] sm:$0xff]
  %v145 = vld [vmem:[%s138 + $0x30] sm:$0xff]
  %v146 = vld [vmem:[%s138 + $0x38] sm:$0xff]
  %147 = vset.pattern.permute.xlu0 0
  %148 = vperm.xlu0 %147, %v139
  %v149 = vpop.permute.xlu0 %148
  %150 = vset.pattern.permute.xlu0 0
  %151 = vperm.xlu0 %150, %v140
  %v152 = vpop.permute.xlu0 %151
  %153 = vset.pattern.permute.xlu0 0
  %154 = vperm.xlu0 %153, %v141
  %v155 = vpop.permute.xlu0 %154
  %156 = vset.pattern.permute.xlu0 0
  %157 = vperm.xlu0 %156, %v142
  %v158 = vpop.permute.xlu0 %157
  %159 = vset.pattern.permute.xlu0 0
  %160 = vperm.xlu0 %159, %v143
  %v161 = vpop.permute.xlu0 %160
  %162 = vset.pattern.permute.xlu0 0
  %163 = vperm.xlu0 %162, %v144
  %v164 = vpop.permute.xlu0 %163
  %165 = vset.pattern.permute.xlu0 0
  %166 = vperm.xlu0 %165, %v145
  %v167 = vpop.permute.xlu0 %166
  %168 = vset.pattern.permute.xlu0 0
  %169 = vperm.xlu0 %168, %v146
  %v170 = vpop.permute.xlu0 %169
  %vm171 = vcmp.eq.s32.totalorder %v149, %v24
  %vm172 = vcmp.eq.s32.totalorder %v152, %v24
  %vm173 = vcmp.eq.s32.totalorder %v155, %v24
  %vm174 = vcmp.eq.s32.totalorder %v158, %v24
  %vm175 = vcmp.eq.s32.totalorder %v161, %v24
  %vm176 = vcmp.eq.s32.totalorder %v164, %v24
  %vm177 = vcmp.eq.s32.totalorder %v167, %v24
  %vm178 = vcmp.eq.s32.totalorder %v170, %v24
  %v179 = vsel %vm171, 1, 0
  %v180 = vsel %vm172, 1, 0
  %v181 = vsel %vm173, 1, 0
  %v182 = vsel %vm174, 1, 0
  %v183 = vsel %vm175, 1, 0
  %v184 = vsel %vm176, 1, 0
  %v185 = vsel %vm177, 1, 0
  %v186 = vsel %vm178, 1, 0
  %v187 = vcvt.s32.f32 %v179
  %v188 = vcvt.s32.f32 %v180
  %v189 = vcvt.s32.f32 %v181
  %v190 = vcvt.s32.f32 %v182
  %v191 = vcvt.s32.f32 %v183
  %v192 = vcvt.s32.f32 %v184
  %v193 = vcvt.s32.f32 %v185
  %v194 = vcvt.s32.f32 %v186
  %s195 = scalar_lea.vmem %s0, 192
  %v196 = vld [vmem:[%s195] sm:$0xff]
  %v197 = vld [vmem:[%s195 + $0x8] sm:$0xff]
  %v198 = vld [vmem:[%s195 + $0x10] sm:$0xff]
  %v199 = vld [vmem:[%s195 + $0x18] sm:$0xff]
  %v200 = vld [vmem:[%s195 + $0x20] sm:$0xff]
  %v201 = vld [vmem:[%s195 + $0x28] sm:$0xff]
  %v202 = vld [vmem:[%s195 + $0x30] sm:$0xff]
  %v203 = vld [vmem:[%s195 + $0x38] sm:$0xff]
  %204 = vset.pattern.permute.xlu0 0
  %205 = vperm.xlu0 %204, %v196
  %v206 = vpop.permute.xlu0 %205
  %207 = vset.pattern.permute.xlu0 0
  %208 = vperm.xlu0 %207, %v197
  %v209 = vpop.permute.xlu0 %208
  %210 = vset.pattern.permute.xlu0 0
  %211 = vperm.xlu0 %210, %v198
  %v212 = vpop.permute.xlu0 %211
  %213 = vset.pattern.permute.xlu0 0
  %214 = vperm.xlu0 %213, %v199
  %v215 = vpop.permute.xlu0 %214
  %216 = vset.pattern.permute.xlu0 0
  %217 = vperm.xlu0 %216, %v200
  %v218 = vpop.permute.xlu0 %217
  %219 = vset.pattern.permute.xlu0 0
  %220 = vperm.xlu0 %219, %v201
  %v221 = vpop.permute.xlu0 %220
  %222 = vset.pattern.permute.xlu0 0
  %223 = vperm.xlu0 %222, %v202
  %v224 = vpop.permute.xlu0 %223
  %225 = vset.pattern.permute.xlu0 0
  %226 = vperm.xlu0 %225, %v203
  %v227 = vpop.permute.xlu0 %226
  %vm228 = vcmp.eq.s32.totalorder %v206, %v24
  %vm229 = vcmp.eq.s32.totalorder %v209, %v24
  %vm230 = vcmp.eq.s32.totalorder %v212, %v24
  %vm231 = vcmp.eq.s32.totalorder %v215, %v24
  %vm232 = vcmp.eq.s32.totalorder %v218, %v24
  %vm233 = vcmp.eq.s32.totalorder %v221, %v24
  %vm234 = vcmp.eq.s32.totalorder %v224, %v24
  %vm235 = vcmp.eq.s32.totalorder %v227, %v24
  %v236 = vsel %vm228, 1, 0
  %v237 = vsel %vm229, 1, 0
  %v238 = vsel %vm230, 1, 0
  %v239 = vsel %vm231, 1, 0
  %v240 = vsel %vm232, 1, 0
  %v241 = vsel %vm233, 1, 0
  %v242 = vsel %vm234, 1, 0
  %v243 = vsel %vm235, 1, 0
  %v244 = vcvt.s32.f32 %v236
  %v245 = vcvt.s32.f32 %v237
  %v246 = vcvt.s32.f32 %v238
  %v247 = vcvt.s32.f32 %v239
  %v248 = vcvt.s32.f32 %v240
  %v249 = vcvt.s32.f32 %v241
  %v250 = vcvt.s32.f32 %v242
  %v251 = vcvt.s32.f32 %v243
  %v252 = vld [vmem:[%s1] sm:$0xff]
  %v253 = vld [vmem:[%s1 + $0x8] sm:$0xff]
  %v254 = vld [vmem:[%s1 + $0x10] sm:$0xff]
  %v255 = vld [vmem:[%s1 + $0x18] sm:$0xff]
  %v256 = vld [vmem:[%s1 + $0x20] sm:$0xff]
  %v257 = vld [vmem:[%s1 + $0x28] sm:$0xff]
  %v258 = vld [vmem:[%s1 + $0x30] sm:$0xff]
  %v259 = vld [vmem:[%s1 + $0x38] sm:$0xff]
  %v260 = vld [vmem:[%s1 + $0x40] sm:$0xff]
  %v261 = vld [vmem:[%s1 + $0x48] sm:$0xff]
  %v262 = vld [vmem:[%s1 + $0x50] sm:$0xff]
  %v263 = vld [vmem:[%s1 + $0x58] sm:$0xff]
  %v264 = vld [vmem:[%s1 + $0x60] sm:$0xff]
  %v265 = vld [vmem:[%s1 + $0x68] sm:$0xff]
  %v266 = vld [vmem:[%s1 + $0x70] sm:$0xff]
  %v267 = vld [vmem:[%s1 + $0x78] sm:$0xff]
  %v268 = vld [vmem:[%s1 + $0x80] sm:$0xff]
  %v269 = vld [vmem:[%s1 + $0x88] sm:$0xff]
  %v270 = vld [vmem:[%s1 + $0x90] sm:$0xff]
  %v271 = vld [vmem:[%s1 + $0x98] sm:$0xff]
  %v272 = vld [vmem:[%s1 + $0xa0] sm:$0xff]
  %v273 = vld [vmem:[%s1 + $0xa8] sm:$0xff]
  %v274 = vld [vmem:[%s1 + $0xb0] sm:$0xff]
  %v275 = vld [vmem:[%s1 + $0xb8] sm:$0xff]
  %v276 = vld [vmem:[%s1 + $0xc0] sm:$0xff]
  %v277 = vld [vmem:[%s1 + $0xc8] sm:$0xff]
  %v278 = vld [vmem:[%s1 + $0xd0] sm:$0xff]
  %v279 = vld [vmem:[%s1 + $0xd8] sm:$0xff]
  %v280 = vld [vmem:[%s1 + $0xe0] sm:$0xff]
  %v281 = vld [vmem:[%s1 + $0xe8] sm:$0xff]
  %v282 = vld [vmem:[%s1 + $0xf0] sm:$0xff]
  %v283 = vld [vmem:[%s1 + $0xf8] sm:$0xff]
  %v284 = vld [vmem:[%s1 + $0x100] sm:$0xff]
  %v285 = vld [vmem:[%s1 + $0x108] sm:$0xff]
  %v286 = vld [vmem:[%s1 + $0x110] sm:$0xff]
  %v287 = vld [vmem:[%s1 + $0x118] sm:$0xff]
  %v288 = vld [vmem:[%s1 + $0x120] sm:$0xff]
  %v289 = vld [vmem:[%s1 + $0x128] sm:$0xff]
  %v290 = vld [vmem:[%s1 + $0x130] sm:$0xff]
  %v291 = vld [vmem:[%s1 + $0x138] sm:$0xff]
  %v292 = vld [vmem:[%s1 + $0x140] sm:$0xff]
  %v293 = vld [vmem:[%s1 + $0x148] sm:$0xff]
  %v294 = vld [vmem:[%s1 + $0x150] sm:$0xff]
  %v295 = vld [vmem:[%s1 + $0x158] sm:$0xff]
  %v296 = vld [vmem:[%s1 + $0x160] sm:$0xff]
  %v297 = vld [vmem:[%s1 + $0x168] sm:$0xff]
  %v298 = vld [vmem:[%s1 + $0x170] sm:$0xff]
  %v299 = vld [vmem:[%s1 + $0x178] sm:$0xff]
  %v300 = vld [vmem:[%s1 + $0x180] sm:$0xff]
  %v301 = vld [vmem:[%s1 + $0x188] sm:$0xff]
  %v302 = vld [vmem:[%s1 + $0x190] sm:$0xff]
  %v303 = vld [vmem:[%s1 + $0x198] sm:$0xff]
  %v304 = vld [vmem:[%s1 + $0x1a0] sm:$0xff]
  %v305 = vld [vmem:[%s1 + $0x1a8] sm:$0xff]
  %v306 = vld [vmem:[%s1 + $0x1b0] sm:$0xff]
  %v307 = vld [vmem:[%s1 + $0x1b8] sm:$0xff]
  %v308 = vld [vmem:[%s1 + $0x1c0] sm:$0xff]
  %v309 = vld [vmem:[%s1 + $0x1c8] sm:$0xff]
  %v310 = vld [vmem:[%s1 + $0x1d0] sm:$0xff]
  %v311 = vld [vmem:[%s1 + $0x1d8] sm:$0xff]
  %v312 = vld [vmem:[%s1 + $0x1e0] sm:$0xff]
  %v313 = vld [vmem:[%s1 + $0x1e8] sm:$0xff]
  %v314 = vld [vmem:[%s1 + $0x1f0] sm:$0xff]
  %v315 = vld [vmem:[%s1 + $0x1f8] sm:$0xff]
  %316 = vmatprep.subr.mxu0 0.0
  %317 = vmatpush1.msra.mxu0 %v252
  %318 = vmatprep.subr.mxu0 0.0
  %319 = vmatpush1.msra.mxu0 %v253
  %320 = vmatprep.subr.mxu0 0.0
  %321 = vmatpush1.msra.mxu0 %v254
  %322 = vmatprep.subr.mxu0 0.0
  %323 = vmatpush1.msra.mxu0 %v255
  %324 = vmatprep.subr.mxu0 0.0
  %325 = vmatpush1.msra.mxu0 %v256
  %326 = vmatprep.subr.mxu0 0.0
  %327 = vmatpush1.msra.mxu0 %v257
  %328 = vmatprep.subr.mxu0 0.0
  %329 = vmatpush1.msra.mxu0 %v258
  %330 = vmatprep.subr.mxu0 0.0
  %331 = vmatpush1.msra.mxu0 %v259
  %332 = vmatprep.subr.mxu0 0.0
  %333 = vmatpush1.msra.mxu0 %v260
  %334 = vmatprep.subr.mxu0 0.0
  %335 = vmatpush1.msra.mxu0 %v261
  %336 = vmatprep.subr.mxu0 0.0
  %337 = vmatpush1.msra.mxu0 %v262
  %338 = vmatprep.subr.mxu0 0.0
  %339 = vmatpush1.msra.mxu0 %v263
  %340 = vmatprep.subr.mxu0 0.0
  %341 = vmatpush1.msra.mxu0 %v264
  %342 = vmatprep.subr.mxu0 0.0
  %343 = vmatpush1.msra.mxu0 %v265
  %344 = vmatprep.subr.mxu0 0.0
  %345 = vmatpush1.msra.mxu0 %v266
  %346 = vmatprep.subr.mxu0 0.0
  %347 = vmatpush1.msra.mxu0 %v267
  %348 = vmatprep.subr.mxu0 0.0
  %349 = vmatpush1.msra.mxu0 %v268
  %350 = vmatprep.subr.mxu0 0.0
  %351 = vmatpush1.msra.mxu0 %v269
  %352 = vmatprep.subr.mxu0 0.0
  %353 = vmatpush1.msra.mxu0 %v270
  %354 = vmatprep.subr.mxu0 0.0
  %355 = vmatpush1.msra.mxu0 %v271
  %356 = vmatprep.subr.mxu0 0.0
  %357 = vmatpush1.msra.mxu0 %v272
  %358 = vmatprep.subr.mxu0 0.0
  %359 = vmatpush1.msra.mxu0 %v273
  %360 = vmatprep.subr.mxu0 0.0
  %361 = vmatpush1.msra.mxu0 %v274
  %362 = vmatprep.subr.mxu0 0.0
  %363 = vmatpush1.msra.mxu0 %v275
  %364 = vmatprep.subr.mxu0 0.0
  %365 = vmatpush1.msra.mxu0 %v276
  %366 = vmatprep.subr.mxu0 0.0
  %367 = vmatpush1.msra.mxu0 %v277
  %368 = vmatprep.subr.mxu0 0.0
  %369 = vmatpush1.msra.mxu0 %v278
  %370 = vmatprep.subr.mxu0 0.0
  %371 = vmatpush1.msra.mxu0 %v279
  %372 = vmatprep.subr.mxu0 0.0
  %373 = vmatpush1.msra.mxu0 %v280
  %374 = vmatprep.subr.mxu0 0.0
  %375 = vmatpush1.msra.mxu0 %v281
  %376 = vmatprep.subr.mxu0 0.0
  %377 = vmatpush1.msra.mxu0 %v282
  %378 = vmatprep.subr.mxu0 0.0
  %379 = vmatpush1.msra.mxu0 %v283
  %380 = vmatprep.mubr.f32.mxu0 %v130
  %381 = vmatmul.mubr.f32.gmra.mrb[0].mxu0 %v73
  %v382 = vpop.f32.mrb[0].mxu0
  %v383 = vadd.f32 0.0, %v382
  %v384 = vpop.f32.mrb[0].mxu0
  %385 = vmatprep.mubr.f32.mxu0 %v131
  %386 = vmatmul.mubr.f32.gmra.mrb[0].mxu0 %v74
  %v387 = vpop.f32.mrb[0].mxu0
  %v388 = vadd.f32 0.0, %v387
  %v389 = vpop.f32.mrb[0].mxu0
  %390 = vmatprep.mubr.f32.mxu0 %v132
  %391 = vmatmul.mubr.f32.gmra.mrb[0].mxu0 %v75
  %v392 = vpop.f32.mrb[0].mxu0
  %v393 = vadd.f32 0.0, %v392
  %v394 = vpop.f32.mrb[0].mxu0
  %395 = vmatprep.mubr.f32.mxu0 %v133
  %396 = vmatmul.mubr.f32.gmra.mrb[0].mxu0 %v76
  %v397 = vpop.f32.mrb[0].mxu0
  %v398 = vadd.f32 0.0, %v397
  %v399 = vpop.f32.mrb[0].mxu0
  %400 = vmatprep.mubr.f32.mxu0 %v134
  %401 = vmatmul.mubr.f32.gmra.mrb[0].mxu0 %v77
  %v402 = vpop.f32.mrb[0].mxu0
  %v403 = vadd.f32 0.0, %v402
  %v404 = vpop.f32.mrb[0].mxu0
  %405 = vmatprep.mubr.f32.mxu0 %v135
  %406 = vmatmul.mubr.f32.gmra.mrb[0].mxu0 %v78
  %v407 = vpop.f32.mrb[0].mxu0
  %v408 = vadd.f32 0.0, %v407
  %v409 = vpop.f32.mrb[0].mxu0
  %410 = vmatprep.mubr.f32.mxu0 %v136
  %411 = vmatmul.mubr.f32.gmra.mrb[0].mxu0 %v79
  %v412 = vpop.f32.mrb[0].mxu0
  %v413 = vadd.f32 0.0, %v412
  %v414 = vpop.f32.mrb[0].mxu0
  %415 = vmatprep.mubr.f32.mxu0 %v137
  %416 = vmatmul.mubr.f32.gmra.mrb[0].mxu0 %v80
  %v417 = vpop.f32.mrb[0].mxu0
  %v418 = vadd.f32 0.0, %v417
  %v419 = vpop.f32.mrb[0].mxu0
  %420 = vdwg.mxu0
  %421 = vmatprep.subr.mxu0 0.0
  %422 = vmatpush1.msra.mxu0 %v284
  %423 = vmatprep.subr.mxu0 0.0
  %424 = vmatpush1.msra.mxu0 %v285
  %425 = vmatprep.subr.mxu0 0.0
  %426 = vmatpush1.msra.mxu0 %v286
  %427 = vmatprep.subr.mxu0 0.0
  %428 = vmatpush1.msra.mxu0 %v287
  %429 = vmatprep.subr.mxu0 0.0
  %430 = vmatpush1.msra.mxu0 %v288
  %431 = vmatprep.subr.mxu0 0.0
  %432 = vmatpush1.msra.mxu0 %v289
  %433 = vmatprep.subr.mxu0 0.0
  %434 = vmatpush1.msra.mxu0 %v290
  %435 = vmatprep.subr.mxu0 0.0
  %436 = vmatpush1.msra.mxu0 %v291
  %437 = vmatprep.subr.mxu0 0.0
  %438 = vmatpush1.msra.mxu0 %v292
  %439 = vmatprep.subr.mxu0 0.0
  %440 = vmatpush1.msra.mxu0 %v293
  %441 = vmatprep.subr.mxu0 0.0
  %442 = vmatpush1.msra.mxu0 %v294
  %443 = vmatprep.subr.mxu0 0.0
  %444 = vmatpush1.msra.mxu0 %v295
  %445 = vmatprep.subr.mxu0 0.0
  %446 = vmatpush1.msra.mxu0 %v296
  %447 = vmatprep.subr.mxu0 0.0
  %448 = vmatpush1.msra.mxu0 %v297
  %449 = vmatprep.subr.mxu0 0.0
  %450 = vmatpush1.msra.mxu0 %v298
  %451 = vmatprep.subr.mxu0 0.0
  %452 = vmatpush1.msra.mxu0 %v299
  %453 = vmatprep.subr.mxu0 0.0
  %454 = vmatpush1.msra.mxu0 %v300
  %455 = vmatprep.subr.mxu0 0.0
  %456 = vmatpush1.msra.mxu0 %v301
  %457 = vmatprep.subr.mxu0 0.0
  %458 = vmatpush1.msra.mxu0 %v302
  %459 = vmatprep.subr.mxu0 0.0
  %460 = vmatpush1.msra.mxu0 %v303
  %461 = vmatprep.subr.mxu0 0.0
  %462 = vmatpush1.msra.mxu0 %v304
  %463 = vmatprep.subr.mxu0 0.0
  %464 = vmatpush1.msra.mxu0 %v305
  %465 = vmatprep.subr.mxu0 0.0
  %466 = vmatpush1.msra.mxu0 %v306
  %467 = vmatprep.subr.mxu0 0.0
  %468 = vmatpush1.msra.mxu0 %v307
  %469 = vmatprep.subr.mxu0 0.0
  %470 = vmatpush1.msra.mxu0 %v308
  %471 = vmatprep.subr.mxu0 0.0
  %472 = vmatpush1.msra.mxu0 %v309
  %473 = vmatprep.subr.mxu0 0.0
  %474 = vmatpush1.msra.mxu0 %v310
  %475 = vmatprep.subr.mxu0 0.0
  %476 = vmatpush1.msra.mxu0 %v311
  %477 = vmatprep.subr.mxu0 0.0
  %478 = vmatpush1.msra.mxu0 %v312
  %479 = vmatprep.subr.mxu0 0.0
  %480 = vmatpush1.msra.mxu0 %v313
  %481 = vmatprep.subr.mxu0 0.0
  %482 = vmatpush1.msra.mxu0 %v314
  %483 = vmatprep.subr.mxu0 0.0
  %484 = vmatpush1.msra.mxu0 %v315
  %485 = vmatprep.mubr.f32.mxu0 %v244
  %486 = vmatmul.mubr.f32.gmra.mrb[0].mxu0 %v187
  %v487 = vpop.f32.mrb[0].mxu0
  %v488 = vadd.f32 %v383, %v487
  %v489 = vpop.f32.mrb[0].mxu0
  %490 = vmatprep.mubr.f32.mxu0 %v245
  %491 = vmatmul.mubr.f32.gmra.mrb[0].mxu0 %v188
  %v492 = vpop.f32.mrb[0].mxu0
  %v493 = vadd.f32 %v388, %v492
  %v494 = vpop.f32.mrb[0].mxu0
  %495 = vmatprep.mubr.f32.mxu0 %v246
  %496 = vmatmul.mubr.f32.gmra.mrb[0].mxu0 %v189
  %v497 = vpop.f32.mrb[0].mxu0
  %v498 = vadd.f32 %v393, %v497
  %v499 = vpop.f32.mrb[0].mxu0
  %500 = vmatprep.mubr.f32.mxu0 %v247
  %501 = vmatmul.mubr.f32.gmra.mrb[0].mxu0 %v190
  %v502 = vpop.f32.mrb[0].mxu0
  %v503 = vadd.f32 %v398, %v502
  %v504 = vpop.f32.mrb[0].mxu0
  %505 = vmatprep.mubr.f32.mxu0 %v248
  %506 = vmatmul.mubr.f32.gmra.mrb[0].mxu0 %v191
  %v507 = vpop.f32.mrb[0].mxu0
  %v508 = vadd.f32 %v403, %v507
  %v509 = vpop.f32.mrb[0].mxu0
  %510 = vmatprep.mubr.f32.mxu0 %v249
  %511 = vmatmul.mubr.f32.gmra.mrb[0].mxu0 %v192
  %v512 = vpop.f32.mrb[0].mxu0
  %v513 = vadd.f32 %v408, %v512
  %v514 = vpop.f32.mrb[0].mxu0
  %515 = vmatprep.mubr.f32.mxu0 %v250
  %516 = vmatmul.mubr.f32.gmra.mrb[0].mxu0 %v193
  %v517 = vpop.f32.mrb[0].mxu0
  %v518 = vadd.f32 %v413, %v517
  %v519 = vpop.f32.mrb[0].mxu0
  %520 = vmatprep.mubr.f32.mxu0 %v251
  %521 = vmatmul.mubr.f32.gmra.mrb[0].mxu0 %v194
  %v522 = vpop.f32.mrb[0].mxu0
  %v523 = vadd.f32 %v418, %v522
  %v524 = vpop.f32.mrb[0].mxu0
  %525 = vdwg.mxu0
  %v526 = vld [vmem:[%s2] sm:$0x1]
  %v528 = vlaneseq
  %v529 = vshrl.u32 %v528, 7
  %v530 = vsub.s32 0, %v529
  %v531 = vrot.slane %v526, %v530
  %v533 = vadd.f32 %v488, %v531
  %v534 = vadd.f32 %v493, %v531
  %v535 = vadd.f32 %v498, %v531
  %v536 = vadd.f32 %v503, %v531
  %v537 = vadd.f32 %v508, %v531
  %v538 = vadd.f32 %v513, %v531
  %v539 = vadd.f32 %v518, %v531
  %v540 = vadd.f32 %v523, %v531
  %v541 = vmax.f32 %v533, 0.0
  %v542 = vmax.f32 %v534, 0.0
  %v543 = vmax.f32 %v535, 0.0
  %v544 = vmax.f32 %v536, 0.0
  %v545 = vmax.f32 %v537, 0.0
  %v546 = vmax.f32 %v538, 0.0
  %v547 = vmax.f32 %v539, 0.0
  %v548 = vmax.f32 %v540, 0.0
  %v549 = vld [vmem:[%s3] sm:$0xff]
  %v550 = vadd.f32 %v541, %v549
  %v551 = vadd.f32 %v542, %v549
  %v552 = vadd.f32 %v543, %v549
  %v553 = vadd.f32 %v544, %v549
  %v554 = vadd.f32 %v545, %v549
  %v555 = vadd.f32 %v546, %v549
  %v556 = vadd.f32 %v547, %v549
  %v557 = vadd.f32 %v548, %v549
  %v558 = vrot.slane %v550, 4
  %v559 = vmax.f32 %v550, %v558
  %v560 = vrot.slane %v559, 2
  %v561 = vmax.f32 %v559, %v560
  %v562 = vrot.slane %v561, 1
  %v563 = vmax.f32 %v561, %v562
  %v564 = vrot.slane %v551, 4
  %v565 = vmax.f32 %v551, %v564
  %v566 = vrot.slane %v565, 2
  %v567 = vmax.f32 %v565, %v566
  %v568 = vrot.slane %v567, 1
  %v569 = vmax.f32 %v567, %v568
  %v570 = vrot.slane %v552, 4
  %v571 = vmax.f32 %v552, %v570
  %v572 = vrot.slane %v571, 2
  %v573 = vmax.f32 %v571, %v572
  %v574 = vrot.slane %v573, 1
  %v575 = vmax.f32 %v573, %v574
  %v576 = vrot.slane %v553, 4
  %v577 = vmax.f32 %v553, %v576
  %v578 = vrot.slane %v577, 2
  %v579 = vmax.f32 %v577, %v578
  %v580 = vrot.slane %v579, 1
  %v581 = vmax.f32 %v579, %v580
  %v582 = vrot.slane %v554, 4
  %v583 = vmax.f32 %v554, %v582
  %v584 = vrot.slane %v583, 2
  %v585 = vmax.f32 %v583, %v584
  %v586 = vrot.slane %v585, 1
  %v587 = vmax.f32 %v585, %v586
  %v588 = vrot.slane %v555, 4
  %v589 = vmax.f32 %v555, %v588
  %v590 = vrot.slane %v589, 2
  %v591 = vmax.f32 %v589, %v590
  %v592 = vrot.slane %v591, 1
  %v593 = vmax.f32 %v591, %v592
  %v594 = vrot.slane %v556, 4
  %v595 = vmax.f32 %v556, %v594
  %v596 = vrot.slane %v595, 2
  %v597 = vmax.f32 %v595, %v596
  %v598 = vrot.slane %v597, 1
  %v599 = vmax.f32 %v597, %v598
  %v600 = vrot.slane %v557, 4
  %v601 = vmax.f32 %v557, %v600
  %v602 = vrot.slane %v601, 2
  %v603 = vmax.f32 %v601, %v602
  %v604 = vrot.slane %v603, 1
  %v605 = vmax.f32 %v603, %v604
  %v606 = vld [vmem:[%s4] sm:$0xff]
  %v607 = vld [vmem:[%s4 + $0x8] sm:$0xff]
  %v608 = vld [vmem:[%s4 + $0x10] sm:$0xff]
  %v609 = vld [vmem:[%s4 + $0x18] sm:$0xff]
  %v610 = vld [vmem:[%s4 + $0x20] sm:$0xff]
  %v611 = vld [vmem:[%s4 + $0x28] sm:$0xff]
  %v612 = vld [vmem:[%s4 + $0x30] sm:$0xff]
  %v613 = vld [vmem:[%s4 + $0x38] sm:$0xff]
  %v614 = vld [vmem:[%s4 + $0x40] sm:$0xff]
  %v615 = vld [vmem:[%s4 + $0x48] sm:$0xff]
  %v616 = vld [vmem:[%s4 + $0x50] sm:$0xff]
  %v617 = vld [vmem:[%s4 + $0x58] sm:$0xff]
  %v618 = vld [vmem:[%s4 + $0x60] sm:$0xff]
  %v619 = vld [vmem:[%s4 + $0x68] sm:$0xff]
  %v620 = vld [vmem:[%s4 + $0x70] sm:$0xff]
  %v621 = vld [vmem:[%s4 + $0x78] sm:$0xff]
  %v622 = vld [vmem:[%s5] sm:$0x1]
  %v624 = vlaneseq
  %v625 = vshrl.u32 %v624, 7
  %v626 = vsub.s32 0, %v625
  %v627 = vrot.slane %v622, %v626
  %vm637 = vcmask 1041409
  %v638 = vsel %vm637, %v569, %v563
  %vm639 = vcmask 1042434
  %v640 = vsel %vm639, %v575, %v638
  %vm641 = vcmask 1043459
  %v642 = vsel %vm641, %v581, %v640
  %vm643 = vcmask 1044484
  %v644 = vsel %vm643, %v587, %v642
  %vm645 = vcmask 1045509
  %v646 = vsel %vm645, %v593, %v644
  %vm647 = vcmask 1046534
  %v648 = vsel %vm647, %v599, %v646
  %vm649 = vcmask 1047559
  %v650 = vsel %vm649, %v605, %v648
  %652 = vmatprep.subr.mxu0 0.0
  %653 = vmatpush1.msra.mxu0 %v606
  %654 = vmatprep.subr.mxu0 0.0
  %655 = vmatpush1.msra.mxu0 %v607
  %656 = vmatprep.subr.mxu0 0.0
  %657 = vmatpush1.msra.mxu0 %v608
  %658 = vmatprep.subr.mxu0 0.0
  %659 = vmatpush1.msra.mxu0 %v609
  %660 = vmatprep.subr.mxu0 0.0
  %661 = vmatpush1.msra.mxu0 %v610
  %662 = vmatprep.subr.mxu0 0.0
  %663 = vmatpush1.msra.mxu0 %v611
  %664 = vmatprep.subr.mxu0 0.0
  %665 = vmatpush1.msra.mxu0 %v612
  %666 = vmatprep.subr.mxu0 0.0
  %667 = vmatpush1.msra.mxu0 %v613
  %668 = vmatprep.subr.mxu0 0.0
  %669 = vmatpush1.msra.mxu0 %v614
  %670 = vmatprep.subr.mxu0 0.0
  %671 = vmatpush1.msra.mxu0 %v615
  %672 = vmatprep.subr.mxu0 0.0
  %673 = vmatpush1.msra.mxu0 %v616
  %674 = vmatprep.subr.mxu0 0.0
  %675 = vmatpush1.msra.mxu0 %v617
  %676 = vmatprep.subr.mxu0 0.0
  %677 = vmatpush1.msra.mxu0 %v618
  %678 = vmatprep.subr.mxu0 0.0
  %679 = vmatpush1.msra.mxu0 %v619
  %680 = vmatprep.subr.mxu0 0.0
  %681 = vmatpush1.msra.mxu0 %v620
  %682 = vmatprep.subr.mxu0 0.0
  %683 = vmatpush1.msra.mxu0 %v621
  %684 = vmatprep.subr.mxu0 0.0
  %685 = vmatpush1.msra.mxu0 0.0
  %686 = vmatprep.subr.mxu0 0.0
  %687 = vmatpush1.msra.mxu0 0.0
  %688 = vmatprep.subr.mxu0 0.0
  %689 = vmatpush1.msra.mxu0 0.0
  %690 = vmatprep.subr.mxu0 0.0
  %691 = vmatpush1.msra.mxu0 0.0
  %692 = vmatprep.subr.mxu0 0.0
  %693 = vmatpush1.msra.mxu0 0.0
  %694 = vmatprep.subr.mxu0 0.0
  %695 = vmatpush1.msra.mxu0 0.0
  %696 = vmatprep.subr.mxu0 0.0
  %697 = vmatpush1.msra.mxu0 0.0
  %698 = vmatprep.subr.mxu0 0.0
  %699 = vmatpush1.msra.mxu0 0.0
  %700 = vmatprep.subr.mxu0 0.0
  %701 = vmatpush1.msra.mxu0 0.0
  %702 = vmatprep.subr.mxu0 0.0
  %703 = vmatpush1.msra.mxu0 0.0
  %704 = vmatprep.subr.mxu0 0.0
  %705 = vmatpush1.msra.mxu0 0.0
  %706 = vmatprep.subr.mxu0 0.0
  %707 = vmatpush1.msra.mxu0 0.0
  %708 = vmatprep.subr.mxu0 0.0
  %709 = vmatpush1.msra.mxu0 0.0
  %710 = vmatprep.subr.mxu0 0.0
  %711 = vmatpush1.msra.mxu0 0.0
  %712 = vmatprep.subr.mxu0 0.0
  %713 = vmatpush1.msra.mxu0 0.0
  %714 = vmatprep.subr.mxu0 0.0
  %715 = vmatpush1.msra.mxu0 0.0
  %716 = vmatprep.mubr.f32.mxu0 0.0
  %717 = vmatmul.mubr.f32.gmra.mrb[0].mxu0 %v650
  %v718 = vpop.f32.mrb[0].mxu0
  %v719 = vadd.f32 %v627, %v718
  %v720 = vpop.f32.mrb[0].mxu0
  %721 = vdwg.mxu0
  %722 = vst [vmem:[%s6] sm:$0xff] %v719
  // Predicated region
  $region26: #{_forward.1} parent=0 // pred_check
    _
  $region27: #{_forward.1} parent=0 // pred_check_branch
    %724 = sbr.rel (0) target = $region29
  $region28: #{_forward.1} parent=0 // pred_region
    _
  $region29: #{_forward.1} parent=0 // pred_fallthru
    _
  // Predicated region
  $region30: #{_forward.1} parent=0 // pred_check
    _
  $region31: #{_forward.1} parent=0 // pred_check_branch
    %726 = sbr.rel (0) target = $region33
  $region32: #{_forward.1} parent=0 // pred_region
    _
  $region33: #{_forward.1} parent=0 // pred_fallthru
    _

</llo_original>
